<compile_context>
chip_gen: v7x
topology: tpu7x:2x2x1
jax: 0.10.0
libtpu: 0.0.40
codegen_flags: <defaults>
</compile_context>

<pallas_src>
import functools
import numpy as np
import jax
import jax.numpy as jnp
from jax.experimental import pallas as pl
from jax.experimental.pallas import tpu as pltpu

KPL = 2  # kernels_per_layer (module default)


# --------------------------------------------------------------------------- kernel
def upds_fused_kernel(x_ref, wup_ref, bup_ref, wrow_ref, brow_ref,
                      g_ref, b_ref, avg_ref, mask_ref, o_ref, pad_ref,
                      *, N, H, W, C, eps):
    """Fused UpDS forward; all activations stay VMEM-resident.

    Row layout of the activation scratch / output: r = a*(N*H) + n*H + i, i.e. the
    two ConvTranspose output parities (h2 = 2*i + a) are two contiguous blocks, so
    every h-shifted view needed by the 3x3 convs is a contiguous 2-D slice.
    Lane layout: l = w2*C + c (lane-dense, L = 2W*C).

    x_ref    : (N*H, W*C)   input rows, lanes = (w, c)
    wup_ref  : (W*C, 2L)    ConvTranspose2d packed as ONE block matrix, cols = (a, w2, c)
    bup_ref  : (1, 2L)      ConvTranspose2d bias tiled over (a, w2)
    wrow_ref : (2, 3L, L)   per layer: fused (depthwise3x3 + pointwise1x1) conv with the
                            W shift / W zero-padding baked in; 3 h-taps stacked on K
    brow_ref : (2, 1, L)    fused conv bias tiled over w2
    g_ref    : (2, 1, L)    BN gamma tiled over w2
    b_ref    : (2, 1, L)    BN beta  tiled over w2
    avg_ref  : (L, L)       kron(ones(2W,2W), eye(C)): per-channel sum over w2, broadcast back
    mask_ref : (N*H, 2)     col 0: 0 where i == 0, col 1: 0 where i == H-1 (H padding masks)
    o_ref    : (R, L)       output rows (parity-split order), lane-dense final store
    pad_ref  : (R, L)       VMEM scratch holding the current activation (no halo rows)
    """
    W2 = 2 * W
    L = W2 * C
    NH = N * H
    R = 2 * NH
    inv_cnt = 1.0 / float(N * 2 * H * W2)          # 1 / (N * H2 * W2)

    # ---- ConvTranspose2d(C, C, 2, 2): ONE merged MXU matmul; columns ordered
    # (parity a, w2, c) so the stride-2 W interleave happens on the MXU and the two
    # parity halves land as two ALIGNED bulk stores (no strided / masked row stores,
    # no scratch zeroing -- the H padding is applied by the row masks below).
    y = jnp.dot(x_ref[...], wup_ref[...],
                preferred_element_type=jnp.float32) + bup_ref[...]      # (NH, 2L)
    pad_ref[0:NH, :] = y[:, 0:L]        # parity a=0 rows (h2 = 2i),   (n, i) order
    pad_ref[NH:R, :] = y[:, L:2 * L]    # parity a=1 rows (h2 = 2i+1), (n, i) order

    m_top = mask_ref[:, 0:1]            # (NH, 1): zero where i == 0      (top pad)
    m_bot = mask_ref[:, 1:2]            # (NH, 1): zero where i == H - 1  (bottom pad)
    avg = avg_ref[...]

    # ---- 2 x [ fused depthwise3x3+pointwise1x1 -> BatchNorm(batch stats) -> ReLU ]
    for layer in range(2):
        # Contiguous (sublane-shifted) views of the parity-split activation buffer.
        p0 = pad_ref[0:NH, :]                           # a=0 rows at i
        p1 = pad_ref[NH:R, :]                           # a=1 rows at i
        p1_up = pad_ref[NH - 1:R - 1, :] * m_top        # a=1 rows at i-1 (masked top pad)
        p0_dn = pad_ref[1:NH + 1, :] * m_bot            # a=0 rows at i+1 (masked bottom pad)

        # One fused (R, 3L) x (3L, L) MXU matmul per layer: the 3 h-taps of the
        # 3x3 conv are lane-concatenated; both output parities share the weight.
        lhs = jnp.concatenate(
            [jnp.concatenate([p1_up, p0, p1], axis=1),   # outputs at h2 = 2i
             jnp.concatenate([p0, p1, p0_dn], axis=1)],  # outputs at h2 = 2i+1
            axis=0)                                      # (R, 3L)
        z = jnp.dot(lhs, wrow_ref[layer],
                    preferred_element_type=jnp.float32) + brow_ref[layer]   # (R, L)

        # Training-mode BatchNorm with exact batch stats (whole batch resident).
        # var = E[z^2] - mean^2, mean folded into the affine term: the two M=1 stats
        # matmuls are independent and the (R, L) centering pass is removed.
        s1 = jnp.dot(jnp.sum(z, axis=0, keepdims=True), avg,
                     preferred_element_type=jnp.float32)                    # (1, L)
        s2 = jnp.dot(jnp.sum(z * z, axis=0, keepdims=True), avg,
                     preferred_element_type=jnp.float32)                    # (1, L)
        mean = s1 * inv_cnt
        var = s2 * inv_cnt - mean * mean
        scale = g_ref[layer] * jax.lax.rsqrt(var + eps)                     # (1, L)
        shift = b_ref[layer] - mean * scale                                 # (1, L)
        act = jnp.maximum(z * scale + shift, 0.0)                           # (R, L)

        if layer == 0:
            pad_ref[...] = act          # feed conv #2 (same parity-split layout)
        else:
            o_ref[...] = act            # lane-dense final store
    # TODO(synk): emit BN running_mean/running_var as extra outputs if this feeds training.


# --------------------------------------------------------------------------- wrapper
def upds_forward(x, prepped):
    """x: (B, V, T, Heads, H, W) float32 -> (B, V, T, Heads, 2H, 2W)."""
    B, V, T, Hd, H, W = x.shape
    C = T * Hd
    N = B * V
    H2, W2 = 2 * H, 2 * W
    L = W2 * C
    NH = N * H
    R = N * H2

    # Module (NCHW-ish) I/O -> lane-dense rows; tiny one-shot XLA glue.
    x_rows = (x.reshape(N, C, H, W).transpose(0, 2, 3, 1)       # NHWC
               .reshape(NH, W * C).astype(jnp.float32))

    # H-padding masks for the shifted views (compile-time constants).
    i_idx = np.tile(np.arange(H), N)
    mask = jnp.asarray(np.stack([(i_idx != 0), (i_idx != H - 1)],
                                axis=1).astype(np.float32))      # (NH, 2)

    kernel = functools.partial(upds_fused_kernel, N=N, H=H, W=W, C=C, eps=1e-5)
    # TODO(synk): at production feature-map sizes add a 'parallel' row-tiled grid
    # (v7x megacore, 64 MiB VMEM) with a 2-pass BN; a single launch is optimal here.
    out2d = pl.pallas_call(
        kernel,
        out_shape=jax.ShapeDtypeStruct((R, L), jnp.float32),
        scratch_shapes=[pltpu.VMEM((R, L), jnp.float32)],
    )(x_rows, prepped["wup"], prepped["bup"], prepped["wrow"], prepped["brow"],
      prepped["bn_g"], prepped["bn_b"], prepped["avg"], mask)

    # rows = (parity a, n, i), lanes = (w2, c) -> back to the module's view.
    out = out2d.reshape(2, N, H, W2, C).transpose(1, 4, 2, 0, 3)  # (n, c, i, a, w2)
    out = out.reshape(N, C, H2, W2)
    return out.reshape(B, V, T, Hd, H2, W2)


# --------------------------------------------------------------------------- params
def init_params(key, in_ch, out_ch, kpl=KPL):
    mid = out_ch  # DoubleConvDS default: mid_channels = out_channels
    ks = jax.random.split(key, 10)

    def w(k, shape, fan_in):
        return jax.random.normal(k, shape, jnp.float32) / jnp.sqrt(float(fan_in))

    return {
        "up_w": w(ks[0], (in_ch, in_ch, 2, 2), in_ch * 4),
        "up_b": w(ks[1], (in_ch,), in_ch * 4),
        "dw1_w": w(ks[2], (in_ch * kpl, 1, 3, 3), 9),
        "dw1_b": w(ks[3], (in_ch * kpl,), 9),
        "pw1_w": w(ks[4], (mid, in_ch * kpl, 1, 1), in_ch * kpl),
        "pw1_b": w(ks[5], (mid,), in_ch * kpl),
        "bn1_g": jnp.ones((mid,), jnp.float32),
        "bn1_b": jnp.zeros((mid,), jnp.float32),
        "dw2_w": w(ks[6], (mid * kpl, 1, 3, 3), 9),
        "dw2_b": w(ks[7], (mid * kpl,), 9),
        "pw2_w": w(ks[8], (out_ch, mid * kpl, 1, 1), mid * kpl),
        "pw2_b": w(ks[9], (out_ch,), mid * kpl),
        "bn2_g": jnp.ones((out_ch,), jnp.float32),
        "bn2_b": jnp.zeros((out_ch,), jnp.float32),
    }


def prepare_params(params, H, W, kpl=KPL):
    """Repack the PyTorch-layout weights ONCE into the MXU-friendly block matrices
    consumed by the fused kernel (kept out of the per-forward hot path)."""
    C = params["up_w"].shape[0]
    mid = params["pw1_w"].shape[0]
    out_ch = params["pw2_w"].shape[0]
    assert C == mid == out_ch, "UpDS requires in_ch == mid == out_ch (== T*Heads)"
    W2 = 2 * W
    L = W2 * C
    f32 = jnp.float32

    # ConvTranspose2d(C, C, 2, 2) -> ONE (W*C, 2L) block matrix, columns (a, w2, c):
    # rows (j, ci) scatter to cols (a, 2j+b, co) with weight up_w[ci, co, a, b].
    up_w = params["up_w"].astype(f32)                        # (Cin, Cout, 2, 2)
    halves = []
    for a in range(2):
        m = jnp.zeros((W * C, L), f32)
        for b in range(2):
            sel = jnp.zeros((W, W2), f32).at[jnp.arange(W), 2 * jnp.arange(W) + b].set(1.0)
            m = m + jnp.kron(sel, up_w[:, :, a, b])
        halves.append(m)
    wup = jnp.concatenate(halves, axis=1)                         # (W*C, 2L)
    bup = jnp.tile(params["up_b"].astype(f32), 2 * W2)[None, :]   # (1, 2L)

    def fuse_ds(dw_w, dw_b, pw_w, pw_b):
        # depthwise(3x3, groups=C, kpl) then pointwise(1x1) == dense 3x3 conv:
        #   F[o, c, dy, dx] = sum_m pw[o, c*kpl+m] * dw[c*kpl+m, dy, dx]
        pw2 = pw_w[:, :, 0, 0].astype(f32)                              # (C, C*kpl)
        F = jnp.einsum("ocm,cmyx->ocyx",
                       pw2.reshape(C, C, kpl),
                       dw_w[:, 0].astype(f32).reshape(C, kpl, 3, 3))    # (o, c, dy, dx)
        bias = pw_b.astype(f32) + pw2 @ dw_b.astype(f32)                # (C,)
        mats = []
        for dy in range(3):    # dy-th h-tap = input row offset (dy - 1) vs. output row
            m = jnp.zeros((L, L), f32)
            for d in (-1, 0, 1):   # W shift and W zero-padding baked into the band
                m = m + jnp.kron(jnp.eye(W2, k=-d, dtype=f32), F[:, :, dy, d + 1].T)
            mats.append(m)
        # Stack the 3 h-taps along the contraction axis -> (3L, L).
        return jnp.concatenate(mats, axis=0), jnp.tile(bias, W2)[None, :]

    w1, b1 = fuse_ds(params["dw1_w"], params["dw1_b"], params["pw1_w"], params["pw1_b"])
    w2m, b2 = fuse_ds(params["dw2_w"], params["dw2_b"], params["pw2_w"], params["pw2_b"])

    tile_w = lambda v: jnp.tile(v.astype(f32), W2)[None, :]             # (1, L)
    # TODO(synk): bf16 packing of wup/wrow/avg (2x MXU rate) deliberately skipped: it
    # does not fit the 2e-4 numerical budget of the correctness check below.
    return {
        "wup": wup,
        "bup": bup,
        "wrow": jnp.stack([w1, w2m]),                                   # (2, 3L, L)
        "brow": jnp.stack([b1, b2]),                                    # (2, 1, L)
        "bn_g": jnp.stack([tile_w(params["bn1_g"]), tile_w(params["bn2_g"])]),
        "bn_b": jnp.stack([tile_w(params["bn1_b"]), tile_w(params["bn2_b"])]),
        "avg": jnp.kron(jnp.ones((W2, W2), f32), jnp.eye(C, dtype=f32)),  # (L, L)
    }


# --------------------------------------------------------------------------- pure-JAX reference
def reference_forward(x, params, kpl=KPL, eps=1e-5):
    B, V, T, Hd, H, W = x.shape
    C = T * Hd
    N = B * V
    xn = x.reshape(N, C, H, W)
    # ConvTranspose2d 2x2 stride 2 (no overlap -> einsum)
    y = jnp.einsum("nihw,ioab->nohawb", xn, params["up_w"]).reshape(N, C, 2 * H, 2 * W)
    y = y + params["up_b"][None, :, None, None]

    def dsconv(z, dww, dwb, pww, pwb):
        Cz = z.shape[1]
        d = jax.lax.conv_general_dilated(
            z, dww, window_strides=(1, 1), padding=((1, 1), (1, 1)),
            dimension_numbers=("NCHW", "OIHW", "NCHW"), feature_group_count=Cz)
        d = d + dwb[None, :, None, None]
        p = jnp.einsum("nchw,oc->nohw", d, pww.reshape(pww.shape[0], -1))
        return p + pwb[None, :, None, None]

    def bn_relu(z, g, b):
        mean = jnp.mean(z, axis=(0, 2, 3), keepdims=True)
        var = jnp.var(z, axis=(0, 2, 3), keepdims=True)  # biased, matches PyTorch
        zn = (z - mean) / jnp.sqrt(var + eps)
        return jnp.maximum(zn * g[None, :, None, None] + b[None, :, None, None], 0.0)

    z1 = dsconv(y, params["dw1_w"], params["dw1_b"], params["pw1_w"], params["pw1_b"])
    a1 = bn_relu(z1, params["bn1_g"], params["bn1_b"])
    z2 = dsconv(a1, params["dw2_w"], params["dw2_b"], params["pw2_w"], params["pw2_b"])
    a2 = bn_relu(z2, params["bn2_g"], params["bn2_b"])
    return a2.reshape(B, V, T, Hd, 2 * H, 2 * W)


# --------------------------------------------------------------------------- main
if __name__ == "__main__":
    B, V, T, Heads = 2, 2, 4, 2
    H = W = 8
    in_ch = T * Heads          # 8 -> post-upsample lane width 2W*C = 128 (fully lane-dense)
    out_ch = in_ch             # final .view(B,V,T,Heads,h,w) requires out_ch == T*Heads

    key = jax.random.PRNGKey(0)
    kx, kp = jax.random.split(key)
    x = jax.random.normal(kx, (B, V, T, Heads, H, W), jnp.float32)
    params = init_params(kp, in_ch, out_ch)
    prepped = prepare_params(params, H, W)     # one-time weight packing (not in hot path)

    fwd = jax.jit(upds_forward)
    out = jax.block_until_ready(fwd(x, prepped))
    assert out.shape == (B, V, T, Heads, 2 * H, 2 * W)

    ref = reference_forward(x, params)
    np.testing.assert_allclose(np.asarray(out), np.asarray(ref), rtol=2e-4, atol=2e-4)
    print("KERNEL_OK")
</pallas_src>

<mosaic_0001>
module attributes {stable_mosaic.version = 11 : i64} {
  func.func @upds_fused_kernel(%arg0: memref<32x64xf32, #tpu.memory_space<vmem>>, %arg1: memref<64x256xf32, #tpu.memory_space<vmem>>, %arg2: memref<1x256xf32, #tpu.memory_space<vmem>>, %arg3: memref<2x384x128xf32, #tpu.memory_space<vmem>>, %arg4: memref<2x1x128xf32, #tpu.memory_space<vmem>>, %arg5: memref<2x1x128xf32, #tpu.memory_space<vmem>>, %arg6: memref<2x1x128xf32, #tpu.memory_space<vmem>>, %arg7: memref<128x128xf32, #tpu.memory_space<vmem>>, %arg8: memref<32x2xf32, #tpu.memory_space<vmem>>, %arg9: memref<64x128xf32, #tpu.memory_space<vmem>>, %arg10: memref<64x128xf32, #tpu.memory_space<vmem>>) attributes {dimension_semantics = [], scalar_prefetch = 0 : i64, scratch_operands = 1 : i64, tpu.core_type = #tpu.core_type<tc>} {
    %c0 = arith.constant 0 : index
    %c0_0 = arith.constant 0 : index
    %0 = vector.load %arg0[%c0, %c0_0] : memref<32x64xf32, #tpu.memory_space<vmem>>, vector<32x64xf32>
    %c0_1 = arith.constant 0 : index
    %c0_2 = arith.constant 0 : index
    %1 = vector.load %arg1[%c0_1, %c0_2] : memref<64x256xf32, #tpu.memory_space<vmem>>, vector<64x256xf32>
    %cst = arith.constant dense<0.000000e+00> : vector<32x256xf32>
    %2 = tpu.matmul %0, %1, %cst {dimension_numbers = #tpu.dot_dimension_numbers<[1], [0], [0], [1], [0, 0, 1, 1], [], []>} : vector<32x64xf32>, vector<64x256xf32>, vector<32x256xf32> -> vector<32x256xf32>
    %c0_3 = arith.constant 0 : index
    %c0_4 = arith.constant 0 : index
    %3 = vector.load %arg2[%c0_3, %c0_4] : memref<1x256xf32, #tpu.memory_space<vmem>>, vector<1x256xf32>
    %4 = vector.broadcast %3 : vector<1x256xf32> to vector<32x256xf32>
    %5 = arith.addf %2, %4 : vector<32x256xf32>
    %6 = vector.extract_strided_slice %5 {offsets = [0, 0], sizes = [32, 128], strides = [1, 1]} : vector<32x256xf32> to vector<32x128xf32>
    %c0_5 = arith.constant 0 : index
    %c0_6 = arith.constant 0 : index
    %7 = vector.load %arg10[%c0_5, %c0_6] : memref<64x128xf32, #tpu.memory_space<vmem>>, vector<32x128xf32>
    tpu.vector_store %arg10[%c0_5, %c0_6], %6 {strides = array<i32>} : memref<64x128xf32, #tpu.memory_space<vmem>>, vector<32x128xf32>,
    %8 = vector.extract_strided_slice %5 {offsets = [0, 128], sizes = [32, 128], strides = [1, 1]} : vector<32x256xf32> to vector<32x128xf32>
    %c32 = arith.constant 32 : index
    %c0_7 = arith.constant 0 : index
    %9 = vector.load %arg10[%c32, %c0_7] : memref<64x128xf32, #tpu.memory_space<vmem>>, vector<32x128xf32>
    tpu.vector_store %arg10[%c32, %c0_7], %8 {strides = array<i32>} : memref<64x128xf32, #tpu.memory_space<vmem>>, vector<32x128xf32>,
    %c0_8 = arith.constant 0 : index
    %c0_9 = arith.constant 0 : index
    %10 = vector.load %arg8[%c0_8, %c0_9] : memref<32x2xf32, #tpu.memory_space<vmem>>, vector<32x1xf32>
    %c0_10 = arith.constant 0 : index
    %c1 = arith.constant 1 : index
    %11 = vector.load %arg8[%c0_10, %c1] : memref<32x2xf32, #tpu.memory_space<vmem>>, vector<32x1xf32>
    %c0_11 = arith.constant 0 : index
    %c0_12 = arith.constant 0 : index
    %12 = vector.load %arg7[%c0_11, %c0_12] : memref<128x128xf32, #tpu.memory_space<vmem>>, vector<128x128xf32>
    %c0_13 = arith.constant 0 : index
    %c0_14 = arith.constant 0 : index
    %13 = vector.load %arg10[%c0_13, %c0_14] : memref<64x128xf32, #tpu.memory_space<vmem>>, vector<32x128xf32>
    %c32_15 = arith.constant 32 : index
    %c0_16 = arith.constant 0 : index
    %14 = vector.load %arg10[%c32_15, %c0_16] : memref<64x128xf32, #tpu.memory_space<vmem>>, vector<32x128xf32>
    %c31 = arith.constant 31 : index
    %c0_17 = arith.constant 0 : index
    %15 = vector.load %arg10[%c31, %c0_17] : memref<64x128xf32, #tpu.memory_space<vmem>>, vector<32x128xf32>
    %16 = vector.broadcast %10 : vector<32x1xf32> to vector<32x128xf32>
    %17 = arith.mulf %15, %16 : vector<32x128xf32>
    %c1_18 = arith.constant 1 : index
    %c0_19 = arith.constant 0 : index
    %18 = vector.load %arg10[%c1_18, %c0_19] : memref<64x128xf32, #tpu.memory_space<vmem>>, vector<32x128xf32>
    %19 = vector.broadcast %11 : vector<32x1xf32> to vector<32x128xf32>
    %20 = arith.mulf %18, %19 : vector<32x128xf32>
    %21 = tpu.concatenate %17, %13, %14 in 1 : vector<32x128xf32>, vector<32x128xf32>, vector<32x128xf32> -> vector<32x384xf32>
    %22 = tpu.concatenate %13, %14, %20 in 1 : vector<32x128xf32>, vector<32x128xf32>, vector<32x128xf32> -> vector<32x384xf32>
    %23 = tpu.concatenate %21, %22 in 0 : vector<32x384xf32>, vector<32x384xf32> -> vector<64x384xf32>
    %c0_20 = arith.constant 0 : index
    %c0_21 = arith.constant 0 : index
    %c0_22 = arith.constant 0 : index
    %24 = vector.load %arg3[%c0_20, %c0_21, %c0_22] : memref<2x384x128xf32, #tpu.memory_space<vmem>>, vector<1x384x128xf32>
    %25 = vector.shape_cast %24 : vector<1x384x128xf32> to vector<384x128xf32>
    %cst_23 = arith.constant dense<0.000000e+00> : vector<64x128xf32>
    %26 = tpu.matmul %23, %25, %cst_23 {dimension_numbers = #tpu.dot_dimension_numbers<[1], [0], [0], [1], [0, 0, 1, 1], [], []>} : vector<64x384xf32>, vector<384x128xf32>, vector<64x128xf32> -> vector<64x128xf32>
    %c0_24 = arith.constant 0 : index
    %c0_25 = arith.constant 0 : index
    %c0_26 = arith.constant 0 : index
    %27 = vector.load %arg4[%c0_24, %c0_25, %c0_26] : memref<2x1x128xf32, #tpu.memory_space<vmem>>, vector<1x1x128xf32>
    %28 = vector.shape_cast %27 : vector<1x1x128xf32> to vector<1x128xf32>
    %29 = vector.broadcast %28 : vector<1x128xf32> to vector<64x128xf32>
    %30 = arith.addf %26, %29 : vector<64x128xf32>
    %cst_27 = arith.constant dense<0.000000e+00> : vector<128xf32>
    %31 = vector.multi_reduction <add>, %30, %cst_27 [0] : vector<64x128xf32> to vector<128xf32>
    %32 = vector.shape_cast %31 : vector<128xf32> to vector<1x128xf32>
    %cst_28 = arith.constant dense<0.000000e+00> : vector<1x128xf32>
    %33 = tpu.matmul %32, %12, %cst_28 {dimension_numbers = #tpu.dot_dimension_numbers<[1], [0], [0], [1], [0, 0, 1, 1], [], []>} : vector<1x128xf32>, vector<128x128xf32>, vector<1x128xf32> -> vector<1x128xf32>
    %34 = arith.mulf %30, %30 : vector<64x128xf32>
    %cst_29 = arith.constant dense<0.000000e+00> : vector<128xf32>
    %35 = vector.multi_reduction <add>, %34, %cst_29 [0] : vector<64x128xf32> to vector<128xf32>
    %36 = vector.shape_cast %35 : vector<128xf32> to vector<1x128xf32>
    %cst_30 = arith.constant dense<0.000000e+00> : vector<1x128xf32>
    %37 = tpu.matmul %36, %12, %cst_30 {dimension_numbers = #tpu.dot_dimension_numbers<[1], [0], [0], [1], [0, 0, 1, 1], [], []>} : vector<1x128xf32>, vector<128x128xf32>, vector<1x128xf32> -> vector<1x128xf32>
    %cst_31 = arith.constant 9.765625E-4 : f32
    %38 = vector.broadcast %cst_31 : f32 to vector<1x128xf32>
    %39 = arith.mulf %33, %38 : vector<1x128xf32>
    %cst_32 = arith.constant 9.765625E-4 : f32
    %40 = vector.broadcast %cst_32 : f32 to vector<1x128xf32>
    %41 = arith.mulf %37, %40 : vector<1x128xf32>
    %42 = arith.mulf %39, %39 : vector<1x128xf32>
    %43 = arith.subf %41, %42 : vector<1x128xf32>
    %c0_33 = arith.constant 0 : index
    %c0_34 = arith.constant 0 : index
    %c0_35 = arith.constant 0 : index
    %44 = vector.load %arg5[%c0_33, %c0_34, %c0_35] : memref<2x1x128xf32, #tpu.memory_space<vmem>>, vector<1x1x128xf32>
    %45 = vector.shape_cast %44 : vector<1x1x128xf32> to vector<1x128xf32>
    %cst_36 = arith.constant 9.99999974E-6 : f32
    %46 = vector.broadcast %cst_36 : f32 to vector<1x128xf32>
    %47 = arith.addf %43, %46 : vector<1x128xf32>
    %48 = math.rsqrt %47 : vector<1x128xf32>
    %49 = arith.mulf %45, %48 : vector<1x128xf32>
    %c0_37 = arith.constant 0 : index
    %c0_38 = arith.constant 0 : index
    %c0_39 = arith.constant 0 : index
    %50 = vector.load %arg6[%c0_37, %c0_38, %c0_39] : memref<2x1x128xf32, #tpu.memory_space<vmem>>, vector<1x1x128xf32>
    %51 = vector.shape_cast %50 : vector<1x1x128xf32> to vector<1x128xf32>
    %52 = arith.mulf %39, %49 : vector<1x128xf32>
    %53 = arith.subf %51, %52 : vector<1x128xf32>
    %54 = vector.broadcast %49 : vector<1x128xf32> to vector<64x128xf32>
    %55 = arith.mulf %30, %54 : vector<64x128xf32>
    %56 = vector.broadcast %53 : vector<1x128xf32> to vector<64x128xf32>
    %57 = arith.addf %55, %56 : vector<64x128xf32>
    %cst_40 = arith.constant 0.000000e+00 : f32
    %58 = vector.broadcast %cst_40 : f32 to vector<64x128xf32>
    %59 = arith.maximumf %57, %58 : vector<64x128xf32>
    %c0_41 = arith.constant 0 : index
    %c0_42 = arith.constant 0 : index
    %60 = vector.load %arg10[%c0_41, %c0_42] : memref<64x128xf32, #tpu.memory_space<vmem>>, vector<64x128xf32>
    tpu.vector_store %arg10[%c0_41, %c0_42], %59 {strides = array<i32>} : memref<64x128xf32, #tpu.memory_space<vmem>>, vector<64x128xf32>,
    %c0_43 = arith.constant 0 : index
    %c0_44 = arith.constant 0 : index
    %61 = vector.load %arg10[%c0_43, %c0_44] : memref<64x128xf32, #tpu.memory_space<vmem>>, vector<32x128xf32>
    %c32_45 = arith.constant 32 : index
    %c0_46 = arith.constant 0 : index
    %62 = vector.load %arg10[%c32_45, %c0_46] : memref<64x128xf32, #tpu.memory_space<vmem>>, vector<32x128xf32>
    %c31_47 = arith.constant 31 : index
    %c0_48 = arith.constant 0 : index
    %63 = vector.load %arg10[%c31_47, %c0_48] : memref<64x128xf32, #tpu.memory_space<vmem>>, vector<32x128xf32>
    %64 = vector.broadcast %10 : vector<32x1xf32> to vector<32x128xf32>
    %65 = arith.mulf %63, %64 : vector<32x128xf32>
    %c1_49 = arith.constant 1 : index
    %c0_50 = arith.constant 0 : index
    %66 = vector.load %arg10[%c1_49, %c0_50] : memref<64x128xf32, #tpu.memory_space<vmem>>, vector<32x128xf32>
    %67 = vector.broadcast %11 : vector<32x1xf32> to vector<32x128xf32>
    %68 = arith.mulf %66, %67 : vector<32x128xf32>
    %69 = tpu.concatenate %65, %61, %62 in 1 : vector<32x128xf32>, vector<32x128xf32>, vector<32x128xf32> -> vector<32x384xf32>
    %70 = tpu.concatenate %61, %62, %68 in 1 : vector<32x128xf32>, vector<32x128xf32>, vector<32x128xf32> -> vector<32x384xf32>
    %71 = tpu.concatenate %69, %70 in 0 : vector<32x384xf32>, vector<32x384xf32> -> vector<64x384xf32>
    %c1_51 = arith.constant 1 : index
    %c0_52 = arith.constant 0 : index
    %c0_53 = arith.constant 0 : index
    %72 = vector.load %arg3[%c1_51, %c0_52, %c0_53] : memref<2x384x128xf32, #tpu.memory_space<vmem>>, vector<1x384x128xf32>
    %73 = vector.shape_cast %72 : vector<1x384x128xf32> to vector<384x128xf32>
    %cst_54 = arith.constant dense<0.000000e+00> : vector<64x128xf32>
    %74 = tpu.matmul %71, %73, %cst_54 {dimension_numbers = #tpu.dot_dimension_numbers<[1], [0], [0], [1], [0, 0, 1, 1], [], []>} : vector<64x384xf32>, vector<384x128xf32>, vector<64x128xf32> -> vector<64x128xf32>
    %c1_55 = arith.constant 1 : index
    %c0_56 = arith.constant 0 : index
    %c0_57 = arith.constant 0 : index
    %75 = vector.load %arg4[%c1_55, %c0_56, %c0_57] : memref<2x1x128xf32, #tpu.memory_space<vmem>>, vector<1x1x128xf32>
    %76 = vector.shape_cast %75 : vector<1x1x128xf32> to vector<1x128xf32>
    %77 = vector.broadcast %76 : vector<1x128xf32> to vector<64x128xf32>
    %78 = arith.addf %74, %77 : vector<64x128xf32>
    %cst_58 = arith.constant dense<0.000000e+00> : vector<128xf32>
    %79 = vector.multi_reduction <add>, %78, %cst_58 [0] : vector<64x128xf32> to vector<128xf32>
    %80 = vector.shape_cast %79 : vector<128xf32> to vector<1x128xf32>
    %cst_59 = arith.constant dense<0.000000e+00> : vector<1x128xf32>
    %81 = tpu.matmul %80, %12, %cst_59 {dimension_numbers = #tpu.dot_dimension_numbers<[1], [0], [0], [1], [0, 0, 1, 1], [], []>} : vector<1x128xf32>, vector<128x128xf32>, vector<1x128xf32> -> vector<1x128xf32>
    %82 = arith.mulf %78, %78 : vector<64x128xf32>
    %cst_60 = arith.constant dense<0.000000e+00> : vector<128xf32>
    %83 = vector.multi_reduction <add>, %82, %cst_60 [0] : vector<64x128xf32> to vector<128xf32>
    %84 = vector.shape_cast %83 : vector<128xf32> to vector<1x128xf32>
    %cst_61 = arith.constant dense<0.000000e+00> : vector<1x128xf32>
    %85 = tpu.matmul %84, %12, %cst_61 {dimension_numbers = #tpu.dot_dimension_numbers<[1], [0], [0], [1], [0, 0, 1, 1], [], []>} : vector<1x128xf32>, vector<128x128xf32>, vector<1x128xf32> -> vector<1x128xf32>
    %cst_62 = arith.constant 9.765625E-4 : f32
    %86 = vector.broadcast %cst_62 : f32 to vector<1x128xf32>
    %87 = arith.mulf %81, %86 : vector<1x128xf32>
    %cst_63 = arith.constant 9.765625E-4 : f32
    %88 = vector.broadcast %cst_63 : f32 to vector<1x128xf32>
    %89 = arith.mulf %85, %88 : vector<1x128xf32>
    %90 = arith.mulf %87, %87 : vector<1x128xf32>
    %91 = arith.subf %89, %90 : vector<1x128xf32>
    %c1_64 = arith.constant 1 : index
    %c0_65 = arith.constant 0 : index
    %c0_66 = arith.constant 0 : index
    %92 = vector.load %arg5[%c1_64, %c0_65, %c0_66] : memref<2x1x128xf32, #tpu.memory_space<vmem>>, vector<1x1x128xf32>
    %93 = vector.shape_cast %92 : vector<1x1x128xf32> to vector<1x128xf32>
    %cst_67 = arith.constant 9.99999974E-6 : f32
    %94 = vector.broadcast %cst_67 : f32 to vector<1x128xf32>
    %95 = arith.addf %91, %94 : vector<1x128xf32>
    %96 = math.rsqrt %95 : vector<1x128xf32>
    %97 = arith.mulf %93, %96 : vector<1x128xf32>
    %c1_68 = arith.constant 1 : index
    %c0_69 = arith.constant 0 : index
    %c0_70 = arith.constant 0 : index
    %98 = vector.load %arg6[%c1_68, %c0_69, %c0_70] : memref<2x1x128xf32, #tpu.memory_space<vmem>>, vector<1x1x128xf32>
    %99 = vector.shape_cast %98 : vector<1x1x128xf32> to vector<1x128xf32>
    %100 = arith.mulf %87, %97 : vector<1x128xf32>
    %101 = arith.subf %99, %100 : vector<1x128xf32>
    %102 = vector.broadcast %97 : vector<1x128xf32> to vector<64x128xf32>
    %103 = arith.mulf %78, %102 : vector<64x128xf32>
    %104 = vector.broadcast %101 : vector<1x128xf32> to vector<64x128xf32>
    %105 = arith.addf %103, %104 : vector<64x128xf32>
    %cst_71 = arith.constant 0.000000e+00 : f32
    %106 = vector.broadcast %cst_71 : f32 to vector<64x128xf32>
    %107 = arith.maximumf %105, %106 : vector<64x128xf32>
    %c0_72 = arith.constant 0 : index
    %c0_73 = arith.constant 0 : index
    %108 = vector.load %arg9[%c0_72, %c0_73] : memref<64x128xf32, #tpu.memory_space<vmem>>, vector<64x128xf32>
    tpu.vector_store %arg9[%c0_72, %c0_73], %107 {strides = array<i32>} : memref<64x128xf32, #tpu.memory_space<vmem>>, vector<64x128xf32>,
    return
  }
}

</mosaic_0001>

<llo_original>
// kernel: upds_forward.1
$region0: #{upds_forward.1}
  #allocation0 [shape = 'u32[]', space=smem, size = 0x4, offset = 0x4, fixed_abs, tag = 'smem constant byte address 0x4 - core index']
  #allocation1 [shape = 'u32[144,128]{1,0:T(1,128)}', space=vmem, size = 0x12000, scoped, tag = 'internal scratch']
  #allocation2 [shape = 'f32[64,128]{1,0:T(8,128)}', space=vmem, size = 0x8000, scoped, tag = 'scratch operand']
  %s0 = inlined_call_operand.vmem [shape: f32[32,64], index: 0, kind: input, shape index: {}]
  %s1 = inlined_call_operand.hbm [shape: f32[64,256], index: 1, kind: input, shape index: {}]
  %s2 = inlined_call_operand.vmem [shape: f32[1,256], index: 2, kind: input, shape index: {}]
  %s3 = inlined_call_operand.vmem [shape: f32[2,384,128], index: 3, kind: input, shape index: {}]
  %s4 = inlined_call_operand.vmem [shape: f32[2,1,128], index: 4, kind: input, shape index: {}]
  %s5 = inlined_call_operand.vmem [shape: f32[2,1,128], index: 5, kind: input, shape index: {}]
  %s6 = inlined_call_operand.vmem [shape: f32[2,1,128], index: 6, kind: input, shape index: {}]
  %s7 = inlined_call_operand.hbm [shape: f32[128,128], index: 7, kind: input, shape index: {}]
  %s8 = inlined_call_operand.vmem [shape: f32[32,2], index: 8, kind: input, shape index: {}]
  %s9 = inlined_call_operand.vmem [shape: f32[64,128], index: 9, kind: output, shape index: {}]
  %s10 = sld [smem:[#allocation0]]
  $region54: #{upds_forward.1} parent=0
    _
  %s12 = ssub.s32 1, %s10
  %s13 = scalar_select 0, %s12, %s10
  $region1: #{upds_forward.1} parent=0
    #allocation3 [shape = 'u8[65536]{0}', space=vmem, size = 0x10000, scoped, tag = 'input window, operand 1, single buffered']
    #allocation4 [shape = 's32[1]{0}', space=sflag, size = 0x4, scoped, tag = 'scoped memory for upds_forward.1']
    #allocation5 [shape = 'u8[65536]{0}', space=vmem, size = 0x10000, scoped, tag = 'input window, operand 7, single buffered']
    #allocation6 [shape = 's32[1]{0}', space=sflag, size = 0x4, scoped, tag = 'scoped memory for upds_forward.1']
    %14 = vsyncpa [#allocation4], 0
    %15 = vsyncpa [#allocation6], 0
    // Predicated region
    $region2: #{upds_forward.1} parent=1 // pred_check
      _
    $region3: #{upds_forward.1} parent=1 // pred_check_branch
      %17 = sbr.rel (0) target = $region5
    $region4: #{upds_forward.1} parent=1 // pred_region
      _
    $region5: #{upds_forward.1} parent=1 // pred_fallthru
      _
    // Predicated region
    $region6: #{upds_forward.1} parent=1 // pred_check
      _
    $region7: #{upds_forward.1} parent=1 // pred_check_branch
      %19 = sbr.rel (0) target = $region9
    $region8: #{upds_forward.1} parent=1 // pred_region
      %s21 = ssub.s32 2048, 2048
      %22 = vsyncadd [#allocation4], %s21
      %s23 = sshll.u32 [#allocation3], 4
      %s24 = int_to_ptr.vmem [resolvable:$true] %s23
      %29 = dma.hbm_to_vmem [thread:$0]  %s1, 2048, %s24, [#allocation4], 256, 256, 16
    $region9: #{upds_forward.1} parent=1 // pred_fallthru
      _
    // Predicated region
    $region10: #{upds_forward.1} parent=1 // pred_check
      _
    $region11: #{upds_forward.1} parent=1 // pred_check_branch
      %31 = sbr.rel (0) target = $region13
    $region12: #{upds_forward.1} parent=1 // pred_region
      _
    $region13: #{upds_forward.1} parent=1 // pred_fallthru
      _
    // Predicated region
    $region14: #{upds_forward.1} parent=1 // pred_check
      _
    $region15: #{upds_forward.1} parent=1 // pred_check_branch
      %33 = sbr.rel (0) target = $region17
    $region16: #{upds_forward.1} parent=1 // pred_region
      _
    $region17: #{upds_forward.1} parent=1 // pred_fallthru
      _
    // Predicated region
    $region18: #{upds_forward.1} parent=1 // pred_check
      _
    $region19: #{upds_forward.1} parent=1 // pred_check_branch
      %35 = sbr.rel (0) target = $region21
    $region20: #{upds_forward.1} parent=1 // pred_region
      _
    $region21: #{upds_forward.1} parent=1 // pred_fallthru
      _
    // Predicated region
    $region22: #{upds_forward.1} parent=1 // pred_check
      _
    $region23: #{upds_forward.1} parent=1 // pred_check_branch
      %37 = sbr.rel (0) target = $region25
    $region24: #{upds_forward.1} parent=1 // pred_region
      _
    $region25: #{upds_forward.1} parent=1 // pred_fallthru
      _
    // Predicated region
    $region26: #{upds_forward.1} parent=1 // pred_check
      _
    $region27: #{upds_forward.1} parent=1 // pred_check_branch
      %39 = sbr.rel (0) target = $region29
    $region28: #{upds_forward.1} parent=1 // pred_region
      _
    $region29: #{upds_forward.1} parent=1 // pred_fallthru
      _
    // Predicated region
    $region30: #{upds_forward.1} parent=1 // pred_check
      _
    $region31: #{upds_forward.1} parent=1 // pred_check_branch
      %41 = sbr.rel (0) target = $region33
    $region32: #{upds_forward.1} parent=1 // pred_region
      %s43 = ssub.s32 2048, 2048
      %44 = vsyncadd [#allocation6], %s43
      %s45 = sshll.u32 [#allocation5], 4
      %s46 = int_to_ptr.vmem [resolvable:$true] %s45
      %51 = dma.hbm_to_vmem [thread:$0]  %s7, 2048, %s46, [#allocation6], 128, 128, 8
    $region33: #{upds_forward.1} parent=1 // pred_fallthru
      _
    // Predicated region
    $region34: #{upds_forward.1} parent=1 // pred_check
      _
    $region35: #{upds_forward.1} parent=1 // pred_check_branch
      %53 = sbr.rel (0) target = $region37
    $region36: #{upds_forward.1} parent=1 // pred_region
      _
    $region37: #{upds_forward.1} parent=1 // pred_fallthru
      _
    // Predicated region
    $region38: #{upds_forward.1} parent=1 // pred_check
      _
    $region39: #{upds_forward.1} parent=1 // pred_check_branch
      %55 = sbr.rel (0) target = $region41
    $region40: #{upds_forward.1} parent=1 // pred_region
      %56 = dma.done [#allocation4], 2048
    $region41: #{upds_forward.1} parent=1 // pred_fallthru
      _
    // Predicated region
    $region42: #{upds_forward.1} parent=1 // pred_check
      _
    $region43: #{upds_forward.1} parent=1 // pred_check_branch
      %58 = sbr.rel (0) target = $region45
    $region44: #{upds_forward.1} parent=1 // pred_region
      %59 = dma.done [#allocation6], 2048
    $region45: #{upds_forward.1} parent=1 // pred_fallthru
      _
    %v60 = vld [vmem:[%s0] sm:$0xff]
    %v61 = vld [vmem:[%s0 + $0x8] sm:$0xff]
    %v62 = vld [vmem:[%s0 + $0x10] sm:$0xff]
    %v63 = vld [vmem:[%s0 + $0x18] sm:$0xff]
    %v64 = vld [vmem:[#allocation3] sm:$0xff]
    %v65 = vld [vmem:[#allocation3 + $0x8] sm:$0xff]
    %v66 = vld [vmem:[#allocation3 + $0x10] sm:$0xff]
    %v67 = vld [vmem:[#allocation3 + $0x18] sm:$0xff]
    %v68 = vld [vmem:[#allocation3 + $0x20] sm:$0xff]
    %v69 = vld [vmem:[#allocation3 + $0x28] sm:$0xff]
    %v70 = vld [vmem:[#allocation3 + $0x30] sm:$0xff]
    %v71 = vld [vmem:[#allocation3 + $0x38] sm:$0xff]
    %v72 = vld [vmem:[#allocation3 + $0x40] sm:$0xff]
    %v73 = vld [vmem:[#allocation3 + $0x48] sm:$0xff]
    %v74 = vld [vmem:[#allocation3 + $0x50] sm:$0xff]
    %v75 = vld [vmem:[#allocation3 + $0x58] sm:$0xff]
    %v76 = vld [vmem:[#allocation3 + $0x60] sm:$0xff]
    %v77 = vld [vmem:[#allocation3 + $0x68] sm:$0xff]
    %v78 = vld [vmem:[#allocation3 + $0x70] sm:$0xff]
    %v79 = vld [vmem:[#allocation3 + $0x78] sm:$0xff]
    %v80 = vld [vmem:[%s2] sm:$0x3]
    %v82 = vlaneseq
    %v83 = vshrl.u32 %v82, 7
    %v84 = vsub.s32 0, %v83
    %v85 = vrot.slane %v80, %v84
    %v86 = vlaneseq
    %v87 = vshrl.u32 %v86, 7
    %v88 = vsub.s32 1, %v87
    %v89 = vrot.slane %v80, %v88
    %vm92 = vcmask 523264
    %v94 = vsel %vm92, %v60, 0
    %v97 = vsel %vm92, %v61, 0
    %v100 = vsel %vm92, %v62, 0
    %v103 = vsel %vm92, %v63, 0
    %105 = vmatprep.subr.mxu0 %v65
    %106 = vmatpush1.msra.mxu0 %v64
    %107 = vmatprep.subr.mxu0 %v67
    %108 = vmatpush1.msra.mxu0 %v66
    %109 = vmatprep.subr.mxu0 %v69
    %110 = vmatpush1.msra.mxu0 %v68
    %111 = vmatprep.subr.mxu0 %v71
    %112 = vmatpush1.msra.mxu0 %v70
    %113 = vmatprep.subr.mxu0 %v73
    %114 = vmatpush1.msra.mxu0 %v72
    %115 = vmatprep.subr.mxu0 %v75
    %116 = vmatpush1.msra.mxu0 %v74
    %117 = vmatprep.subr.mxu0 %v77
    %118 = vmatpush1.msra.mxu0 %v76
    %119 = vmatprep.subr.mxu0 %v79
    %120 = vmatpush1.msra.mxu0 %v78
    %121 = vmatprep.subr.mxu0 0.0
    %122 = vmatpush1.msra.mxu0 0.0
    %123 = vmatprep.subr.mxu0 0.0
    %124 = vmatpush1.msra.mxu0 0.0
    %125 = vmatprep.subr.mxu0 0.0
    %126 = vmatpush1.msra.mxu0 0.0
    %127 = vmatprep.subr.mxu0 0.0
    %128 = vmatpush1.msra.mxu0 0.0
    %129 = vmatprep.subr.mxu0 0.0
    %130 = vmatpush1.msra.mxu0 0.0
    %131 = vmatprep.subr.mxu0 0.0
    %132 = vmatpush1.msra.mxu0 0.0
    %133 = vmatprep.subr.mxu0 0.0
    %134 = vmatpush1.msra.mxu0 0.0
    %135 = vmatprep.subr.mxu0 0.0
    %136 = vmatpush1.msra.mxu0 0.0
    %137 = vmatprep.subr.mxu0 0.0
    %138 = vmatpush1.msra.mxu0 0.0
    %139 = vmatprep.subr.mxu0 0.0
    %140 = vmatpush1.msra.mxu0 0.0
    %141 = vmatprep.subr.mxu0 0.0
    %142 = vmatpush1.msra.mxu0 0.0
    %143 = vmatprep.subr.mxu0 0.0
    %144 = vmatpush1.msra.mxu0 0.0
    %145 = vmatprep.subr.mxu0 0.0
    %146 = vmatpush1.msra.mxu0 0.0
    %147 = vmatprep.subr.mxu0 0.0
    %148 = vmatpush1.msra.mxu0 0.0
    %149 = vmatprep.subr.mxu0 0.0
    %150 = vmatpush1.msra.mxu0 0.0
    %151 = vmatprep.subr.mxu0 0.0
    %152 = vmatpush1.msra.mxu0 0.0
    %153 = vmatprep.subr.mxu0 0.0
    %154 = vmatpush1.msra.mxu0 0.0
    %155 = vmatprep.subr.mxu0 0.0
    %156 = vmatpush1.msra.mxu0 0.0
    %157 = vmatprep.subr.mxu0 0.0
    %158 = vmatpush1.msra.mxu0 0.0
    %159 = vmatprep.subr.mxu0 0.0
    %160 = vmatpush1.msra.mxu0 0.0
    %161 = vmatprep.subr.mxu0 0.0
    %162 = vmatpush1.msra.mxu0 0.0
    %163 = vmatprep.subr.mxu0 0.0
    %164 = vmatpush1.msra.mxu0 0.0
    %165 = vmatprep.subr.mxu0 0.0
    %166 = vmatpush1.msra.mxu0 0.0
    %167 = vmatprep.subr.mxu0 0.0
    %168 = vmatpush1.msra.mxu0 0.0
    %169 = vmatprep.mubr.f32.mxu0 0.0
    %170 = vmatmul.mubr.f32.gmra.mrb[0].mxu0 %v94
    %v171 = vpop.f32.mrb[0].mxu0
    %v172 = vadd.f32 %v85, %v171
    %v173 = vpop.f32.mrb[0].mxu0
    %v174 = vadd.f32 %v89, %v173
    %175 = vmatprep.mubr.f32.mxu0 0.0
    %176 = vmatmul.mubr.f32.gmra.mrb[0].mxu0 %v97
    %v177 = vpop.f32.mrb[0].mxu0
    %v178 = vadd.f32 %v85, %v177
    %v179 = vpop.f32.mrb[0].mxu0
    %v180 = vadd.f32 %v89, %v179
    %181 = vmatprep.mubr.f32.mxu0 0.0
    %182 = vmatmul.mubr.f32.gmra.mrb[0].mxu0 %v100
    %v183 = vpop.f32.mrb[0].mxu0
    %v184 = vadd.f32 %v85, %v183
    %v185 = vpop.f32.mrb[0].mxu0
    %v186 = vadd.f32 %v89, %v185
    %187 = vmatprep.mubr.f32.mxu0 0.0
    %188 = vmatmul.mubr.f32.gmra.mrb[0].mxu0 %v103
    %v189 = vpop.f32.mrb[0].mxu0
    %v190 = vadd.f32 %v85, %v189
    %v191 = vpop.f32.mrb[0].mxu0
    %v192 = vadd.f32 %v89, %v191
    %193 = vdwg.mxu0
    %194 = vst [vmem:[#allocation2] sm:$0xff] %v172
    %195 = vst [vmem:[#allocation2 + $0x8] sm:$0xff] %v178
    %196 = vst [vmem:[#allocation2 + $0x10] sm:$0xff] %v184
    %197 = vst [vmem:[#allocation2 + $0x18] sm:$0xff] %v190
    %198 = vst [vmem:[#allocation2 + $0x20] sm:$0xff] %v174
    %199 = vst [vmem:[#allocation2 + $0x28] sm:$0xff] %v180
    %200 = vst [vmem:[#allocation2 + $0x30] sm:$0xff] %v186
    %201 = vst [vmem:[#allocation2 + $0x38] sm:$0xff] %v192
    %v202 = vld [vmem:[%s8] sm:$0xff]
    %v203 = vld [vmem:[%s8 + $0x8] sm:$0xff]
    %v204 = vld [vmem:[%s8 + $0x10] sm:$0xff]
    %v205 = vld [vmem:[%s8 + $0x18] sm:$0xff]
    %v206 = vld [vmem:[#allocation5] sm:$0xff]
    %v207 = vld [vmem:[#allocation5 + $0x8] sm:$0xff]
    %v208 = vld [vmem:[#allocation5 + $0x10] sm:$0xff]
    %v209 = vld [vmem:[#allocation5 + $0x18] sm:$0xff]
    %v210 = vld [vmem:[#allocation5 + $0x20] sm:$0xff]
    %v211 = vld [vmem:[#allocation5 + $0x28] sm:$0xff]
    %v212 = vld [vmem:[#allocation5 + $0x30] sm:$0xff]
    %v213 = vld [vmem:[#allocation5 + $0x38] sm:$0xff]
    %v214 = vld [vmem:[#allocation5 + $0x40] sm:$0xff]
    %v215 = vld [vmem:[#allocation5 + $0x48] sm:$0xff]
    %v216 = vld [vmem:[#allocation5 + $0x50] sm:$0xff]
    %v217 = vld [vmem:[#allocation5 + $0x58] sm:$0xff]
    %v218 = vld [vmem:[#allocation5 + $0x60] sm:$0xff]
    %v219 = vld [vmem:[#allocation5 + $0x68] sm:$0xff]
    %v220 = vld [vmem:[#allocation5 + $0x70] sm:$0xff]
    %v221 = vld [vmem:[#allocation5 + $0x78] sm:$0xff]
    %v222 = vld [vmem:[#allocation2] sm:$0xff]
    %v223 = vld [vmem:[#allocation2 + $0x8] sm:$0xff]
    %v224 = vld [vmem:[#allocation2 + $0x10] sm:$0xff]
    %v225 = vld [vmem:[#allocation2 + $0x18] sm:$0xff]
    %v226 = vld [vmem:[#allocation2 + $0x20] sm:$0xff]
    %v227 = vld [vmem:[#allocation2 + $0x28] sm:$0xff]
    %v228 = vld [vmem:[#allocation2 + $0x30] sm:$0xff]
    %v229 = vld [vmem:[#allocation2 + $0x38] sm:$0xff]
    %v230 = vld [vmem:[#allocation2 + $0x1f] sm:$0xff]
    %v231 = vld [vmem:[#allocation2 + $0x27] sm:$0xff]
    %v232 = vld [vmem:[#allocation2 + $0x2f] sm:$0xff]
    %v233 = vld [vmem:[#allocation2 + $0x37] sm:$0xff]
    %235 = vset.pattern.permute.xlu0 0
    %236 = vperm.xlu0 %235, %v202
    %v237 = vpop.permute.xlu0 %236
    %240 = vset.pattern.permute.xlu0 0
    %241 = vperm.xlu0 %240, %v203
    %v242 = vpop.permute.xlu0 %241
    %245 = vset.pattern.permute.xlu0 0
    %246 = vperm.xlu0 %245, %v204
    %v247 = vpop.permute.xlu0 %246
    %250 = vset.pattern.permute.xlu0 0
    %251 = vperm.xlu0 %250, %v205
    %v252 = vpop.permute.xlu0 %251
    %v254 = vmul.f32 %v230, %v237
    %v255 = vmul.f32 %v231, %v242
    %v256 = vmul.f32 %v232, %v247
    %v257 = vmul.f32 %v233, %v252
    %v258 = vld [vmem:[#allocation2 + $0x1] sm:$0xff]
    %v259 = vld [vmem:[#allocation2 + $0x9] sm:$0xff]
    %v260 = vld [vmem:[#allocation2 + $0x11] sm:$0xff]
    %v261 = vld [vmem:[#allocation2 + $0x19] sm:$0xff]
    %262 = vset.pattern.permute.xlu0 1
    %263 = vperm.xlu0 %262, %v202
    %v264 = vpop.permute.xlu0 %263
    %266 = vset.pattern.permute.xlu0 1
    %267 = vperm.xlu0 %266, %v203
    %v268 = vpop.permute.xlu0 %267
    %270 = vset.pattern.permute.xlu0 1
    %271 = vperm.xlu0 %270, %v204
    %v272 = vpop.permute.xlu0 %271
    %274 = vset.pattern.permute.xlu0 1
    %275 = vperm.xlu0 %274, %v205
    %v276 = vpop.permute.xlu0 %275
    %v278 = vmul.f32 %v258, %v264
    %v279 = vmul.f32 %v259, %v268
    %v280 = vmul.f32 %v260, %v272
    %v281 = vmul.f32 %v261, %v276
    %v282 = vld [vmem:[%s3] sm:$0xff]
    %v283 = vld [vmem:[%s3 + $0x8] sm:$0xff]
    %v284 = vld [vmem:[%s3 + $0x10] sm:$0xff]
    %v285 = vld [vmem:[%s3 + $0x18] sm:$0xff]
    %v286 = vld [vmem:[%s3 + $0x20] sm:$0xff]
    %v287 = vld [vmem:[%s3 + $0x28] sm:$0xff]
    %v288 = vld [vmem:[%s3 + $0x30] sm:$0xff]
    %v289 = vld [vmem:[%s3 + $0x38] sm:$0xff]
    %v290 = vld [vmem:[%s3 + $0x40] sm:$0xff]
    %v291 = vld [vmem:[%s3 + $0x48] sm:$0xff]
    %v292 = vld [vmem:[%s3 + $0x50] sm:$0xff]
    %v293 = vld [vmem:[%s3 + $0x58] sm:$0xff]
    %v294 = vld [vmem:[%s3 + $0x60] sm:$0xff]
    %v295 = vld [vmem:[%s3 + $0x68] sm:$0xff]
    %v296 = vld [vmem:[%s3 + $0x70] sm:$0xff]
    %v297 = vld [vmem:[%s3 + $0x78] sm:$0xff]
    %v298 = vld [vmem:[%s3 + $0x80] sm:$0xff]
    %v299 = vld [vmem:[%s3 + $0x88] sm:$0xff]
    %v300 = vld [vmem:[%s3 + $0x90] sm:$0xff]
    %v301 = vld [vmem:[%s3 + $0x98] sm:$0xff]
    %v302 = vld [vmem:[%s3 + $0xa0] sm:$0xff]
    %v303 = vld [vmem:[%s3 + $0xa8] sm:$0xff]
    %v304 = vld [vmem:[%s3 + $0xb0] sm:$0xff]
    %v305 = vld [vmem:[%s3 + $0xb8] sm:$0xff]
    %v306 = vld [vmem:[%s3 + $0xc0] sm:$0xff]
    %v307 = vld [vmem:[%s3 + $0xc8] sm:$0xff]
    %v308 = vld [vmem:[%s3 + $0xd0] sm:$0xff]
    %v309 = vld [vmem:[%s3 + $0xd8] sm:$0xff]
    %v310 = vld [vmem:[%s3 + $0xe0] sm:$0xff]
    %v311 = vld [vmem:[%s3 + $0xe8] sm:$0xff]
    %v312 = vld [vmem:[%s3 + $0xf0] sm:$0xff]
    %v313 = vld [vmem:[%s3 + $0xf8] sm:$0xff]
    %v314 = vld [vmem:[%s3 + $0x100] sm:$0xff]
    %v315 = vld [vmem:[%s3 + $0x108] sm:$0xff]
    %v316 = vld [vmem:[%s3 + $0x110] sm:$0xff]
    %v317 = vld [vmem:[%s3 + $0x118] sm:$0xff]
    %v318 = vld [vmem:[%s3 + $0x120] sm:$0xff]
    %v319 = vld [vmem:[%s3 + $0x128] sm:$0xff]
    %v320 = vld [vmem:[%s3 + $0x130] sm:$0xff]
    %v321 = vld [vmem:[%s3 + $0x138] sm:$0xff]
    %v322 = vld [vmem:[%s3 + $0x140] sm:$0xff]
    %v323 = vld [vmem:[%s3 + $0x148] sm:$0xff]
    %v324 = vld [vmem:[%s3 + $0x150] sm:$0xff]
    %v325 = vld [vmem:[%s3 + $0x158] sm:$0xff]
    %v326 = vld [vmem:[%s3 + $0x160] sm:$0xff]
    %v327 = vld [vmem:[%s3 + $0x168] sm:$0xff]
    %v328 = vld [vmem:[%s3 + $0x170] sm:$0xff]
    %v329 = vld [vmem:[%s3 + $0x178] sm:$0xff]
    %v330 = vld [vmem:[%s4] sm:$0x1]
    %v332 = vlaneseq
    %v333 = vshrl.u32 %v332, 7
    %v334 = vsub.s32 0, %v333
    %v335 = vrot.slane %v330, %v334
    %337 = vmatprep.subr.mxu0 0.0
    %338 = vmatpush1.msra.mxu0 %v282
    %339 = vmatprep.subr.mxu0 0.0
    %340 = vmatpush1.msra.mxu0 %v283
    %341 = vmatprep.subr.mxu0 0.0
    %342 = vmatpush1.msra.mxu0 %v284
    %343 = vmatprep.subr.mxu0 0.0
    %344 = vmatpush1.msra.mxu0 %v285
    %345 = vmatprep.subr.mxu0 0.0
    %346 = vmatpush1.msra.mxu0 %v286
    %347 = vmatprep.subr.mxu0 0.0
    %348 = vmatpush1.msra.mxu0 %v287
    %349 = vmatprep.subr.mxu0 0.0
    %350 = vmatpush1.msra.mxu0 %v288
    %351 = vmatprep.subr.mxu0 0.0
    %352 = vmatpush1.msra.mxu0 %v289
    %353 = vmatprep.subr.mxu0 0.0
    %354 = vmatpush1.msra.mxu0 %v290
    %355 = vmatprep.subr.mxu0 0.0
    %356 = vmatpush1.msra.mxu0 %v291
    %357 = vmatprep.subr.mxu0 0.0
    %358 = vmatpush1.msra.mxu0 %v292
    %359 = vmatprep.subr.mxu0 0.0
    %360 = vmatpush1.msra.mxu0 %v293
    %361 = vmatprep.subr.mxu0 0.0
    %362 = vmatpush1.msra.mxu0 %v294
    %363 = vmatprep.subr.mxu0 0.0
    %364 = vmatpush1.msra.mxu0 %v295
    %365 = vmatprep.subr.mxu0 0.0
    %366 = vmatpush1.msra.mxu0 %v296
    %367 = vmatprep.subr.mxu0 0.0
    %368 = vmatpush1.msra.mxu0 %v297
    %369 = vmatprep.subr.mxu0 0.0
    %370 = vmatpush1.msra.mxu0 %v298
    %371 = vmatprep.subr.mxu0 0.0
    %372 = vmatpush1.msra.mxu0 %v299
    %373 = vmatprep.subr.mxu0 0.0
    %374 = vmatpush1.msra.mxu0 %v300
    %375 = vmatprep.subr.mxu0 0.0
    %376 = vmatpush1.msra.mxu0 %v301
    %377 = vmatprep.subr.mxu0 0.0
    %378 = vmatpush1.msra.mxu0 %v302
    %379 = vmatprep.subr.mxu0 0.0
    %380 = vmatpush1.msra.mxu0 %v303
    %381 = vmatprep.subr.mxu0 0.0
    %382 = vmatpush1.msra.mxu0 %v304
    %383 = vmatprep.subr.mxu0 0.0
    %384 = vmatpush1.msra.mxu0 %v305
    %385 = vmatprep.subr.mxu0 0.0
    %386 = vmatpush1.msra.mxu0 %v306
    %387 = vmatprep.subr.mxu0 0.0
    %388 = vmatpush1.msra.mxu0 %v307
    %389 = vmatprep.subr.mxu0 0.0
    %390 = vmatpush1.msra.mxu0 %v308
    %391 = vmatprep.subr.mxu0 0.0
    %392 = vmatpush1.msra.mxu0 %v309
    %393 = vmatprep.subr.mxu0 0.0
    %394 = vmatpush1.msra.mxu0 %v310
    %395 = vmatprep.subr.mxu0 0.0
    %396 = vmatpush1.msra.mxu0 %v311
    %397 = vmatprep.subr.mxu0 0.0
    %398 = vmatpush1.msra.mxu0 %v312
    %399 = vmatprep.subr.mxu0 0.0
    %400 = vmatpush1.msra.mxu0 %v313
    %401 = vmatprep.mubr.f32.mxu0 %v222
    %402 = vmatmul.mubr.f32.gmra.mrb[0].mxu0 %v254
    %v403 = vpop.f32.mrb[0].mxu0
    %v404 = vadd.f32 %v335, %v403
    %v405 = vpop.f32.mrb[0].mxu0
    %406 = vmatprep.mubr.f32.mxu0 %v223
    %407 = vmatmul.mubr.f32.gmra.mrb[0].mxu0 %v255
    %v408 = vpop.f32.mrb[0].mxu0
    %v409 = vadd.f32 %v335, %v408
    %v410 = vpop.f32.mrb[0].mxu0
    %411 = vmatprep.mubr.f32.mxu0 %v224
    %412 = vmatmul.mubr.f32.gmra.mrb[0].mxu0 %v256
    %v413 = vpop.f32.mrb[0].mxu0
    %v414 = vadd.f32 %v335, %v413
    %v415 = vpop.f32.mrb[0].mxu0
    %416 = vmatprep.mubr.f32.mxu0 %v225
    %417 = vmatmul.mubr.f32.gmra.mrb[0].mxu0 %v257
    %v418 = vpop.f32.mrb[0].mxu0
    %v419 = vadd.f32 %v335, %v418
    %v420 = vpop.f32.mrb[0].mxu0
    %421 = vmatprep.mubr.f32.mxu0 %v226
    %422 = vmatmul.mubr.f32.gmra.mrb[0].mxu0 %v222
    %v423 = vpop.f32.mrb[0].mxu0
    %v424 = vadd.f32 %v335, %v423
    %v425 = vpop.f32.mrb[0].mxu0
    %426 = vmatprep.mubr.f32.mxu0 %v227
    %427 = vmatmul.mubr.f32.gmra.mrb[0].mxu0 %v223
    %v428 = vpop.f32.mrb[0].mxu0
    %v429 = vadd.f32 %v335, %v428
    %v430 = vpop.f32.mrb[0].mxu0
    %431 = vmatprep.mubr.f32.mxu0 %v228
    %432 = vmatmul.mubr.f32.gmra.mrb[0].mxu0 %v224
    %v433 = vpop.f32.mrb[0].mxu0
    %v434 = vadd.f32 %v335, %v433
    %v435 = vpop.f32.mrb[0].mxu0
    %436 = vmatprep.mubr.f32.mxu0 %v229
    %437 = vmatmul.mubr.f32.gmra.mrb[0].mxu0 %v225
    %v438 = vpop.f32.mrb[0].mxu0
    %v439 = vadd.f32 %v335, %v438
    %v440 = vpop.f32.mrb[0].mxu0
    %441 = vdwg.mxu0
    %442 = vmatprep.subr.mxu0 0.0
    %443 = vmatpush1.msra.mxu0 %v314
    %444 = vmatprep.subr.mxu0 0.0
    %445 = vmatpush1.msra.mxu0 %v315
    %446 = vmatprep.subr.mxu0 0.0
    %447 = vmatpush1.msra.mxu0 %v316
    %448 = vmatprep.subr.mxu0 0.0
    %449 = vmatpush1.msra.mxu0 %v317
    %450 = vmatprep.subr.mxu0 0.0
    %451 = vmatpush1.msra.mxu0 %v318
    %452 = vmatprep.subr.mxu0 0.0
    %453 = vmatpush1.msra.mxu0 %v319
    %454 = vmatprep.subr.mxu0 0.0
    %455 = vmatpush1.msra.mxu0 %v320
    %456 = vmatprep.subr.mxu0 0.0
    %457 = vmatpush1.msra.mxu0 %v321
    %458 = vmatprep.subr.mxu0 0.0
    %459 = vmatpush1.msra.mxu0 %v322
    %460 = vmatprep.subr.mxu0 0.0
    %461 = vmatpush1.msra.mxu0 %v323
    %462 = vmatprep.subr.mxu0 0.0
    %463 = vmatpush1.msra.mxu0 %v324
    %464 = vmatprep.subr.mxu0 0.0
    %465 = vmatpush1.msra.mxu0 %v325
    %466 = vmatprep.subr.mxu0 0.0
    %467 = vmatpush1.msra.mxu0 %v326
    %468 = vmatprep.subr.mxu0 0.0
    %469 = vmatpush1.msra.mxu0 %v327
    %470 = vmatprep.subr.mxu0 0.0
    %471 = vmatpush1.msra.mxu0 %v328
    %472 = vmatprep.subr.mxu0 0.0
    %473 = vmatpush1.msra.mxu0 %v329
    %474 = vmatprep.subr.mxu0 0.0
    %475 = vmatpush1.msra.mxu0 0.0
    %476 = vmatprep.subr.mxu0 0.0
    %477 = vmatpush1.msra.mxu0 0.0
    %478 = vmatprep.subr.mxu0 0.0
    %479 = vmatpush1.msra.mxu0 0.0
    %480 = vmatprep.subr.mxu0 0.0
    %481 = vmatpush1.msra.mxu0 0.0
    %482 = vmatprep.subr.mxu0 0.0
    %483 = vmatpush1.msra.mxu0 0.0
    %484 = vmatprep.subr.mxu0 0.0
    %485 = vmatpush1.msra.mxu0 0.0
    %486 = vmatprep.subr.mxu0 0.0
    %487 = vmatpush1.msra.mxu0 0.0
    %488 = vmatprep.subr.mxu0 0.0
    %489 = vmatpush1.msra.mxu0 0.0
    %490 = vmatprep.subr.mxu0 0.0
    %491 = vmatpush1.msra.mxu0 0.0
    %492 = vmatprep.subr.mxu0 0.0
    %493 = vmatpush1.msra.mxu0 0.0
    %494 = vmatprep.subr.mxu0 0.0
    %495 = vmatpush1.msra.mxu0 0.0
    %496 = vmatprep.subr.mxu0 0.0
    %497 = vmatpush1.msra.mxu0 0.0
    %498 = vmatprep.subr.mxu0 0.0
    %499 = vmatpush1.msra.mxu0 0.0
    %500 = vmatprep.subr.mxu0 0.0
    %501 = vmatpush1.msra.mxu0 0.0
    %502 = vmatprep.subr.mxu0 0.0
    %503 = vmatpush1.msra.mxu0 0.0
    %504 = vmatprep.subr.mxu0 0.0
    %505 = vmatpush1.msra.mxu0 0.0
    %506 = vmatprep.mubr.f32.mxu0 0.0
    %507 = vmatmul.mubr.f32.gmra.mrb[0].mxu0 %v226
    %v508 = vpop.f32.mrb[0].mxu0
    %v509 = vadd.f32 %v404, %v508
    %v510 = vpop.f32.mrb[0].mxu0
    %511 = vmatprep.mubr.f32.mxu0 0.0
    %512 = vmatmul.mubr.f32.gmra.mrb[0].mxu0 %v227
    %v513 = vpop.f32.mrb[0].mxu0
    %v514 = vadd.f32 %v409, %v513
    %v515 = vpop.f32.mrb[0].mxu0
    %516 = vmatprep.mubr.f32.mxu0 0.0
    %517 = vmatmul.mubr.f32.gmra.mrb[0].mxu0 %v228
    %v518 = vpop.f32.mrb[0].mxu0
    %v519 = vadd.f32 %v414, %v518
    %v520 = vpop.f32.mrb[0].mxu0
    %521 = vmatprep.mubr.f32.mxu0 0.0
    %522 = vmatmul.mubr.f32.gmra.mrb[0].mxu0 %v229
    %v523 = vpop.f32.mrb[0].mxu0
    %v524 = vadd.f32 %v419, %v523
    %v525 = vpop.f32.mrb[0].mxu0
    %526 = vmatprep.mubr.f32.mxu0 0.0
    %527 = vmatmul.mubr.f32.gmra.mrb[0].mxu0 %v278
    %v528 = vpop.f32.mrb[0].mxu0
    %v529 = vadd.f32 %v424, %v528
    %v530 = vpop.f32.mrb[0].mxu0
    %531 = vmatprep.mubr.f32.mxu0 0.0
    %532 = vmatmul.mubr.f32.gmra.mrb[0].mxu0 %v279
    %v533 = vpop.f32.mrb[0].mxu0
    %v534 = vadd.f32 %v429, %v533
    %v535 = vpop.f32.mrb[0].mxu0
    %536 = vmatprep.mubr.f32.mxu0 0.0
    %537 = vmatmul.mubr.f32.gmra.mrb[0].mxu0 %v280
    %v538 = vpop.f32.mrb[0].mxu0
    %v539 = vadd.f32 %v434, %v538
    %v540 = vpop.f32.mrb[0].mxu0
    %541 = vmatprep.mubr.f32.mxu0 0.0
    %542 = vmatmul.mubr.f32.gmra.mrb[0].mxu0 %v281
    %v543 = vpop.f32.mrb[0].mxu0
    %v544 = vadd.f32 %v439, %v543
    %v545 = vpop.f32.mrb[0].mxu0
    %546 = vdwg.mxu0
    %v547 = vadd.f32 %v509, %v514
    %v548 = vadd.f32 %v547, %v519
    %v549 = vadd.f32 %v548, %v524
    %v550 = vadd.f32 %v549, %v529
    %v551 = vadd.f32 %v550, %v534
    %v552 = vadd.f32 %v551, %v539
    %v553 = vadd.f32 %v552, %v544
    %v554 = vrot.slane %v553, 4
    %v555 = vadd.f32 %v553, %v554
    %v556 = vrot.slane %v555, 2
    %v557 = vadd.f32 %v555, %v556
    %v558 = vrot.slane %v557, 1
    %v559 = vadd.f32 %v557, %v558
    %560 = vmatprep.subr.mxu0 0.0
    %561 = vmatpush1.msra.mxu0 %v206
    %562 = vmatprep.subr.mxu0 0.0
    %563 = vmatpush1.msra.mxu0 %v207
    %564 = vmatprep.subr.mxu0 0.0
    %565 = vmatpush1.msra.mxu0 %v208
    %566 = vmatprep.subr.mxu0 0.0
    %567 = vmatpush1.msra.mxu0 %v209
    %568 = vmatprep.subr.mxu0 0.0
    %569 = vmatpush1.msra.mxu0 %v210
    %570 = vmatprep.subr.mxu0 0.0
    %571 = vmatpush1.msra.mxu0 %v211
    %572 = vmatprep.subr.mxu0 0.0
    %573 = vmatpush1.msra.mxu0 %v212
    %574 = vmatprep.subr.mxu0 0.0
    %575 = vmatpush1.msra.mxu0 %v213
    %576 = vmatprep.subr.mxu0 0.0
    %577 = vmatpush1.msra.mxu0 %v214
    %578 = vmatprep.subr.mxu0 0.0
    %579 = vmatpush1.msra.mxu0 %v215
    %580 = vmatprep.subr.mxu0 0.0
    %581 = vmatpush1.msra.mxu0 %v216
    %582 = vmatprep.subr.mxu0 0.0
    %583 = vmatpush1.msra.mxu0 %v217
    %584 = vmatprep.subr.mxu0 0.0
    %585 = vmatpush1.msra.mxu0 %v218
    %586 = vmatprep.subr.mxu0 0.0
    %587 = vmatpush1.msra.mxu0 %v219
    %588 = vmatprep.subr.mxu0 0.0
    %589 = vmatpush1.msra.mxu0 %v220
    %590 = vmatprep.subr.mxu0 0.0
    %591 = vmatpush1.msra.mxu0 %v221
    %592 = vmatprep.subr.mxu0 0.0
    %593 = vmatpush1.msra.mxu0 0.0
    %594 = vmatprep.subr.mxu0 0.0
    %595 = vmatpush1.msra.mxu0 0.0
    %596 = vmatprep.subr.mxu0 0.0
    %597 = vmatpush1.msra.mxu0 0.0
    %598 = vmatprep.subr.mxu0 0.0
    %599 = vmatpush1.msra.mxu0 0.0
    %600 = vmatprep.subr.mxu0 0.0
    %601 = vmatpush1.msra.mxu0 0.0
    %602 = vmatprep.subr.mxu0 0.0
    %603 = vmatpush1.msra.mxu0 0.0
    %604 = vmatprep.subr.mxu0 0.0
    %605 = vmatpush1.msra.mxu0 0.0
    %606 = vmatprep.subr.mxu0 0.0
    %607 = vmatpush1.msra.mxu0 0.0
    %608 = vmatprep.subr.mxu0 0.0
    %609 = vmatpush1.msra.mxu0 0.0
    %610 = vmatprep.subr.mxu0 0.0
    %611 = vmatpush1.msra.mxu0 0.0
    %612 = vmatprep.subr.mxu0 0.0
    %613 = vmatpush1.msra.mxu0 0.0
    %614 = vmatprep.subr.mxu0 0.0
    %615 = vmatpush1.msra.mxu0 0.0
    %616 = vmatprep.subr.mxu0 0.0
    %617 = vmatpush1.msra.mxu0 0.0
    %618 = vmatprep.subr.mxu0 0.0
    %619 = vmatpush1.msra.mxu0 0.0
    %620 = vmatprep.subr.mxu0 0.0
    %621 = vmatpush1.msra.mxu0 0.0
    %622 = vmatprep.subr.mxu0 0.0
    %623 = vmatpush1.msra.mxu0 0.0
    %624 = vmatprep.mubr.f32.mxu0 0.0
    %625 = vmatmul.mubr.f32.gmra.mrb[0].mxu0 %v559
    %v626 = vpop.f32.mrb[0].mxu0
    %v627 = vadd.f32 0.0, %v626
    %v628 = vpop.f32.mrb[0].mxu0
    %629 = vdwg.mxu0
    %v630 = vmul.f32 %v509, %v509
    %v631 = vmul.f32 %v514, %v514
    %v632 = vmul.f32 %v519, %v519
    %v633 = vmul.f32 %v524, %v524
    %v634 = vmul.f32 %v529, %v529
    %v635 = vmul.f32 %v534, %v534
    %v636 = vmul.f32 %v539, %v539
    %v637 = vmul.f32 %v544, %v544
    %v638 = vadd.f32 %v630, %v631
    %v639 = vadd.f32 %v638, %v632
    %v640 = vadd.f32 %v639, %v633
    %v641 = vadd.f32 %v640, %v634
    %v642 = vadd.f32 %v641, %v635
    %v643 = vadd.f32 %v642, %v636
    %v644 = vadd.f32 %v643, %v637
    %v645 = vrot.slane %v644, 4
    %v646 = vadd.f32 %v644, %v645
    %v647 = vrot.slane %v646, 2
    %v648 = vadd.f32 %v646, %v647
    %v649 = vrot.slane %v648, 1
    %v650 = vadd.f32 %v648, %v649
    %651 = vmatprep.subr.mxu0 0.0
    %652 = vmatpush1.msra.mxu0 %v206
    %653 = vmatprep.subr.mxu0 0.0
    %654 = vmatpush1.msra.mxu0 %v207
    %655 = vmatprep.subr.mxu0 0.0
    %656 = vmatpush1.msra.mxu0 %v208
    %657 = vmatprep.subr.mxu0 0.0
    %658 = vmatpush1.msra.mxu0 %v209
    %659 = vmatprep.subr.mxu0 0.0
    %660 = vmatpush1.msra.mxu0 %v210
    %661 = vmatprep.subr.mxu0 0.0
    %662 = vmatpush1.msra.mxu0 %v211
    %663 = vmatprep.subr.mxu0 0.0
    %664 = vmatpush1.msra.mxu0 %v212
    %665 = vmatprep.subr.mxu0 0.0
    %666 = vmatpush1.msra.mxu0 %v213
    %667 = vmatprep.subr.mxu0 0.0
    %668 = vmatpush1.msra.mxu0 %v214
    %669 = vmatprep.subr.mxu0 0.0
    %670 = vmatpush1.msra.mxu0 %v215
    %671 = vmatprep.subr.mxu0 0.0
    %672 = vmatpush1.msra.mxu0 %v216
    %673 = vmatprep.subr.mxu0 0.0
    %674 = vmatpush1.msra.mxu0 %v217
    %675 = vmatprep.subr.mxu0 0.0
    %676 = vmatpush1.msra.mxu0 %v218
    %677 = vmatprep.subr.mxu0 0.0
    %678 = vmatpush1.msra.mxu0 %v219
    %679 = vmatprep.subr.mxu0 0.0
    %680 = vmatpush1.msra.mxu0 %v220
    %681 = vmatprep.subr.mxu0 0.0
    %682 = vmatpush1.msra.mxu0 %v221
    %683 = vmatprep.subr.mxu0 0.0
    %684 = vmatpush1.msra.mxu0 0.0
    %685 = vmatprep.subr.mxu0 0.0
    %686 = vmatpush1.msra.mxu0 0.0
    %687 = vmatprep.subr.mxu0 0.0
    %688 = vmatpush1.msra.mxu0 0.0
    %689 = vmatprep.subr.mxu0 0.0
    %690 = vmatpush1.msra.mxu0 0.0
    %691 = vmatprep.subr.mxu0 0.0
    %692 = vmatpush1.msra.mxu0 0.0
    %693 = vmatprep.subr.mxu0 0.0
    %694 = vmatpush1.msra.mxu0 0.0
    %695 = vmatprep.subr.mxu0 0.0
    %696 = vmatpush1.msra.mxu0 0.0
    %697 = vmatprep.subr.mxu0 0.0
    %698 = vmatpush1.msra.mxu0 0.0
    %699 = vmatprep.subr.mxu0 0.0
    %700 = vmatpush1.msra.mxu0 0.0
    %701 = vmatprep.subr.mxu0 0.0
    %702 = vmatpush1.msra.mxu0 0.0
    %703 = vmatprep.subr.mxu0 0.0
    %704 = vmatpush1.msra.mxu0 0.0
    %705 = vmatprep.subr.mxu0 0.0
    %706 = vmatpush1.msra.mxu0 0.0
    %707 = vmatprep.subr.mxu0 0.0
    %708 = vmatpush1.msra.mxu0 0.0
    %709 = vmatprep.subr.mxu0 0.0
    %710 = vmatpush1.msra.mxu0 0.0
    %711 = vmatprep.subr.mxu0 0.0
    %712 = vmatpush1.msra.mxu0 0.0
    %713 = vmatprep.subr.mxu0 0.0
    %714 = vmatpush1.msra.mxu0 0.0
    %715 = vmatprep.mubr.f32.mxu0 0.0
    %716 = vmatmul.mubr.f32.gmra.mrb[0].mxu0 %v650
    %v717 = vpop.f32.mrb[0].mxu0
    %v718 = vadd.f32 0.0, %v717
    %v719 = vpop.f32.mrb[0].mxu0
    %720 = vdwg.mxu0
    %v721 = vmul.f32 %v627, 0.0009765625
    %v722 = vmul.f32 %v718, 0.0009765625
    %v723 = vmul.f32 %v721, %v721
    %v724 = vsub.f32 %v722, %v723
    %v725 = vld [vmem:[%s5] sm:$0x1]
    %v726 = vadd.f32 %v724, 1e-05
    %v727 = vrsqrt.pop %v726
    %v728 = vmul.f32 %v725, %v727
    %v729 = vld [vmem:[%s6] sm:$0x1]
    %v730 = vmul.f32 %v721, %v728
    %v731 = vsub.f32 %v729, %v730
    %v733 = vlaneseq
    %v734 = vshrl.u32 %v733, 7
    %v735 = vsub.s32 0, %v734
    %v736 = vrot.slane %v728, %v735
    %v738 = vmul.f32 %v509, %v736
    %v739 = vmul.f32 %v514, %v736
    %v740 = vmul.f32 %v519, %v736
    %v741 = vmul.f32 %v524, %v736
    %v742 = vmul.f32 %v529, %v736
    %v743 = vmul.f32 %v534, %v736
    %v744 = vmul.f32 %v539, %v736
    %v745 = vmul.f32 %v544, %v736
    %v747 = vlaneseq
    %v748 = vshrl.u32 %v747, 7
    %v749 = vsub.s32 0, %v748
    %v750 = vrot.slane %v731, %v749
    %v752 = vadd.f32 %v738, %v750
    %v753 = vadd.f32 %v739, %v750
    %v754 = vadd.f32 %v740, %v750
    %v755 = vadd.f32 %v741, %v750
    %v756 = vadd.f32 %v742, %v750
    %v757 = vadd.f32 %v743, %v750
    %v758 = vadd.f32 %v744, %v750
    %v759 = vadd.f32 %v745, %v750
    %v760 = vmax.f32 %v752, 0.0
    %v761 = vmax.f32 %v753, 0.0
    %v762 = vmax.f32 %v754, 0.0
    %v763 = vmax.f32 %v755, 0.0
    %v764 = vmax.f32 %v756, 0.0
    %v765 = vmax.f32 %v757, 0.0
    %v766 = vmax.f32 %v758, 0.0
    %v767 = vmax.f32 %v759, 0.0
    %768 = vst [vmem:[#allocation2] sm:$0xff] %v760
    %769 = vst [vmem:[#allocation2 + $0x8] sm:$0xff] %v761
    %770 = vst [vmem:[#allocation2 + $0x10] sm:$0xff] %v762
    %771 = vst [vmem:[#allocation2 + $0x18] sm:$0xff] %v763
    %772 = vst [vmem:[#allocation2 + $0x20] sm:$0xff] %v764
    %773 = vst [vmem:[#allocation2 + $0x28] sm:$0xff] %v765
    %774 = vst [vmem:[#allocation2 + $0x30] sm:$0xff] %v766
    %775 = vst [vmem:[#allocation2 + $0x38] sm:$0xff] %v767
    %v776 = vld [vmem:[#allocation2] sm:$0xff]
    %v777 = vld [vmem:[#allocation2 + $0x8] sm:$0xff]
    %v778 = vld [vmem:[#allocation2 + $0x10] sm:$0xff]
    %v779 = vld [vmem:[#allocation2 + $0x18] sm:$0xff]
    %v780 = vld [vmem:[#allocation2 + $0x20] sm:$0xff]
    %v781 = vld [vmem:[#allocation2 + $0x28] sm:$0xff]
    %v782 = vld [vmem:[#allocation2 + $0x30] sm:$0xff]
    %v783 = vld [vmem:[#allocation2 + $0x38] sm:$0xff]
    %v784 = vld [vmem:[#allocation2 + $0x1f] sm:$0xff]
    %v785 = vld [vmem:[#allocation2 + $0x27] sm:$0xff]
    %v786 = vld [vmem:[#allocation2 + $0x2f] sm:$0xff]
    %v787 = vld [vmem:[#allocation2 + $0x37] sm:$0xff]
    %v788 = vmul.f32 %v784, %v237
    %v789 = vmul.f32 %v785, %v242
    %v790 = vmul.f32 %v786, %v247
    %v791 = vmul.f32 %v787, %v252
    %v792 = vld [vmem:[#allocation2 + $0x1] sm:$0xff]
    %v793 = vld [vmem:[#allocation2 + $0x9] sm:$0xff]
    %v794 = vld [vmem:[#allocation2 + $0x11] sm:$0xff]
    %v795 = vld [vmem:[#allocation2 + $0x19] sm:$0xff]
    %v796 = vmul.f32 %v792, %v264
    %v797 = vmul.f32 %v793, %v268
    %v798 = vmul.f32 %v794, %v272
    %v799 = vmul.f32 %v795, %v276
    %s800 = scalar_lea.vmem %s3, 384
    %v801 = vld [vmem:[%s800] sm:$0xff]
    %v802 = vld [vmem:[%s800 + $0x8] sm:$0xff]
    %v803 = vld [vmem:[%s800 + $0x10] sm:$0xff]
    %v804 = vld [vmem:[%s800 + $0x18] sm:$0xff]
    %v805 = vld [vmem:[%s800 + $0x20] sm:$0xff]
    %v806 = vld [vmem:[%s800 + $0x28] sm:$0xff]
    %v807 = vld [vmem:[%s800 + $0x30] sm:$0xff]
    %v808 = vld [vmem:[%s800 + $0x38] sm:$0xff]
    %v809 = vld [vmem:[%s800 + $0x40] sm:$0xff]
    %v810 = vld [vmem:[%s800 + $0x48] sm:$0xff]
    %v811 = vld [vmem:[%s800 + $0x50] sm:$0xff]
    %v812 = vld [vmem:[%s800 + $0x58] sm:$0xff]
    %v813 = vld [vmem:[%s800 + $0x60] sm:$0xff]
    %v814 = vld [vmem:[%s800 + $0x68] sm:$0xff]
    %v815 = vld [vmem:[%s800 + $0x70] sm:$0xff]
    %v816 = vld [vmem:[%s800 + $0x78] sm:$0xff]
    %v817 = vld [vmem:[%s800 + $0x80] sm:$0xff]
    %v818 = vld [vmem:[%s800 + $0x88] sm:$0xff]
    %v819 = vld [vmem:[%s800 + $0x90] sm:$0xff]
    %v820 = vld [vmem:[%s800 + $0x98] sm:$0xff]
    %v821 = vld [vmem:[%s800 + $0xa0] sm:$0xff]
    %v822 = vld [vmem:[%s800 + $0xa8] sm:$0xff]
    %v823 = vld [vmem:[%s800 + $0xb0] sm:$0xff]
    %v824 = vld [vmem:[%s800 + $0xb8] sm:$0xff]
    %v825 = vld [vmem:[%s800 + $0xc0] sm:$0xff]
    %v826 = vld [vmem:[%s800 + $0xc8] sm:$0xff]
    %v827 = vld [vmem:[%s800 + $0xd0] sm:$0xff]
    %v828 = vld [vmem:[%s800 + $0xd8] sm:$0xff]
    %v829 = vld [vmem:[%s800 + $0xe0] sm:$0xff]
    %v830 = vld [vmem:[%s800 + $0xe8] sm:$0xff]
    %v831 = vld [vmem:[%s800 + $0xf0] sm:$0xff]
    %v832 = vld [vmem:[%s800 + $0xf8] sm:$0xff]
    %v833 = vld [vmem:[%s800 + $0x100] sm:$0xff]
    %v834 = vld [vmem:[%s800 + $0x108] sm:$0xff]
    %v835 = vld [vmem:[%s800 + $0x110] sm:$0xff]
    %v836 = vld [vmem:[%s800 + $0x118] sm:$0xff]
    %v837 = vld [vmem:[%s800 + $0x120] sm:$0xff]
    %v838 = vld [vmem:[%s800 + $0x128] sm:$0xff]
    %v839 = vld [vmem:[%s800 + $0x130] sm:$0xff]
    %v840 = vld [vmem:[%s800 + $0x138] sm:$0xff]
    %v841 = vld [vmem:[%s800 + $0x140] sm:$0xff]
    %v842 = vld [vmem:[%s800 + $0x148] sm:$0xff]
    %v843 = vld [vmem:[%s800 + $0x150] sm:$0xff]
    %v844 = vld [vmem:[%s800 + $0x158] sm:$0xff]
    %v845 = vld [vmem:[%s800 + $0x160] sm:$0xff]
    %v846 = vld [vmem:[%s800 + $0x168] sm:$0xff]
    %v847 = vld [vmem:[%s800 + $0x170] sm:$0xff]
    %v848 = vld [vmem:[%s800 + $0x178] sm:$0xff]
    %s849 = scalar_lea.vmem %s4, 1
    %v850 = vld [vmem:[%s849] sm:$0x1]
    %v852 = vlaneseq
    %v853 = vshrl.u32 %v852, 7
    %v854 = vsub.s32 0, %v853
    %v855 = vrot.slane %v850, %v854
    %857 = vmatprep.subr.mxu0 0.0
    %858 = vmatpush1.msra.mxu0 %v801
    %859 = vmatprep.subr.mxu0 0.0
    %860 = vmatpush1.msra.mxu0 %v802
    %861 = vmatprep.subr.mxu0 0.0
    %862 = vmatpush1.msra.mxu0 %v803
    %863 = vmatprep.subr.mxu0 0.0
    %864 = vmatpush1.msra.mxu0 %v804
    %865 = vmatprep.subr.mxu0 0.0
    %866 = vmatpush1.msra.mxu0 %v805
    %867 = vmatprep.subr.mxu0 0.0
    %868 = vmatpush1.msra.mxu0 %v806
    %869 = vmatprep.subr.mxu0 0.0
    %870 = vmatpush1.msra.mxu0 %v807
    %871 = vmatprep.subr.mxu0 0.0
    %872 = vmatpush1.msra.mxu0 %v808
    %873 = vmatprep.subr.mxu0 0.0
    %874 = vmatpush1.msra.mxu0 %v809
    %875 = vmatprep.subr.mxu0 0.0
    %876 = vmatpush1.msra.mxu0 %v810
    %877 = vmatprep.subr.mxu0 0.0
    %878 = vmatpush1.msra.mxu0 %v811
    %879 = vmatprep.subr.mxu0 0.0
    %880 = vmatpush1.msra.mxu0 %v812
    %881 = vmatprep.subr.mxu0 0.0
    %882 = vmatpush1.msra.mxu0 %v813
    %883 = vmatprep.subr.mxu0 0.0
    %884 = vmatpush1.msra.mxu0 %v814
    %885 = vmatprep.subr.mxu0 0.0
    %886 = vmatpush1.msra.mxu0 %v815
    %887 = vmatprep.subr.mxu0 0.0
    %888 = vmatpush1.msra.mxu0 %v816
    %889 = vmatprep.subr.mxu0 0.0
    %890 = vmatpush1.msra.mxu0 %v817
    %891 = vmatprep.subr.mxu0 0.0
    %892 = vmatpush1.msra.mxu0 %v818
    %893 = vmatprep.subr.mxu0 0.0
    %894 = vmatpush1.msra.mxu0 %v819
    %895 = vmatprep.subr.mxu0 0.0
    %896 = vmatpush1.msra.mxu0 %v820
    %897 = vmatprep.subr.mxu0 0.0
    %898 = vmatpush1.msra.mxu0 %v821
    %899 = vmatprep.subr.mxu0 0.0
    %900 = vmatpush1.msra.mxu0 %v822
    %901 = vmatprep.subr.mxu0 0.0
    %902 = vmatpush1.msra.mxu0 %v823
    %903 = vmatprep.subr.mxu0 0.0
    %904 = vmatpush1.msra.mxu0 %v824
    %905 = vmatprep.subr.mxu0 0.0
    %906 = vmatpush1.msra.mxu0 %v825
    %907 = vmatprep.subr.mxu0 0.0
    %908 = vmatpush1.msra.mxu0 %v826
    %909 = vmatprep.subr.mxu0 0.0
    %910 = vmatpush1.msra.mxu0 %v827
    %911 = vmatprep.subr.mxu0 0.0
    %912 = vmatpush1.msra.mxu0 %v828
    %913 = vmatprep.subr.mxu0 0.0
    %914 = vmatpush1.msra.mxu0 %v829
    %915 = vmatprep.subr.mxu0 0.0
    %916 = vmatpush1.msra.mxu0 %v830
    %917 = vmatprep.subr.mxu0 0.0
    %918 = vmatpush1.msra.mxu0 %v831
    %919 = vmatprep.subr.mxu0 0.0
    %920 = vmatpush1.msra.mxu0 %v832
    %921 = vmatprep.mubr.f32.mxu0 %v776
    %922 = vmatmul.mubr.f32.gmra.mrb[0].mxu0 %v788
    %v923 = vpop.f32.mrb[0].mxu0
    %v924 = vadd.f32 %v855, %v923
    %v925 = vpop.f32.mrb[0].mxu0
    %926 = vmatprep.mubr.f32.mxu0 %v777
    %927 = vmatmul.mubr.f32.gmra.mrb[0].mxu0 %v789
    %v928 = vpop.f32.mrb[0].mxu0
    %v929 = vadd.f32 %v855, %v928
    %v930 = vpop.f32.mrb[0].mxu0
    %931 = vmatprep.mubr.f32.mxu0 %v778
    %932 = vmatmul.mubr.f32.gmra.mrb[0].mxu0 %v790
    %v933 = vpop.f32.mrb[0].mxu0
    %v934 = vadd.f32 %v855, %v933
    %v935 = vpop.f32.mrb[0].mxu0
    %936 = vmatprep.mubr.f32.mxu0 %v779
    %937 = vmatmul.mubr.f32.gmra.mrb[0].mxu0 %v791
    %v938 = vpop.f32.mrb[0].mxu0
    %v939 = vadd.f32 %v855, %v938
    %v940 = vpop.f32.mrb[0].mxu0
    %941 = vmatprep.mubr.f32.mxu0 %v780
    %942 = vmatmul.mubr.f32.gmra.mrb[0].mxu0 %v776
    %v943 = vpop.f32.mrb[0].mxu0
    %v944 = vadd.f32 %v855, %v943
    %v945 = vpop.f32.mrb[0].mxu0
    %946 = vmatprep.mubr.f32.mxu0 %v781
    %947 = vmatmul.mubr.f32.gmra.mrb[0].mxu0 %v777
    %v948 = vpop.f32.mrb[0].mxu0
    %v949 = vadd.f32 %v855, %v948
    %v950 = vpop.f32.mrb[0].mxu0
    %951 = vmatprep.mubr.f32.mxu0 %v782
    %952 = vmatmul.mubr.f32.gmra.mrb[0].mxu0 %v778
    %v953 = vpop.f32.mrb[0].mxu0
    %v954 = vadd.f32 %v855, %v953
    %v955 = vpop.f32.mrb[0].mxu0
    %956 = vmatprep.mubr.f32.mxu0 %v783
    %957 = vmatmul.mubr.f32.gmra.mrb[0].mxu0 %v779
    %v958 = vpop.f32.mrb[0].mxu0
    %v959 = vadd.f32 %v855, %v958
    %v960 = vpop.f32.mrb[0].mxu0
    %961 = vdwg.mxu0
    %962 = vmatprep.subr.mxu0 0.0
    %963 = vmatpush1.msra.mxu0 %v833
    %964 = vmatprep.subr.mxu0 0.0
    %965 = vmatpush1.msra.mxu0 %v834
    %966 = vmatprep.subr.mxu0 0.0
    %967 = vmatpush1.msra.mxu0 %v835
    %968 = vmatprep.subr.mxu0 0.0
    %969 = vmatpush1.msra.mxu0 %v836
    %970 = vmatprep.subr.mxu0 0.0
    %971 = vmatpush1.msra.mxu0 %v837
    %972 = vmatprep.subr.mxu0 0.0
    %973 = vmatpush1.msra.mxu0 %v838
    %974 = vmatprep.subr.mxu0 0.0
    %975 = vmatpush1.msra.mxu0 %v839
    %976 = vmatprep.subr.mxu0 0.0
    %977 = vmatpush1.msra.mxu0 %v840
    %978 = vmatprep.subr.mxu0 0.0
    %979 = vmatpush1.msra.mxu0 %v841
    %980 = vmatprep.subr.mxu0 0.0
    %981 = vmatpush1.msra.mxu0 %v842
    %982 = vmatprep.subr.mxu0 0.0
    %983 = vmatpush1.msra.mxu0 %v843
    %984 = vmatprep.subr.mxu0 0.0
    %985 = vmatpush1.msra.mxu0 %v844
    %986 = vmatprep.subr.mxu0 0.0
    %987 = vmatpush1.msra.mxu0 %v845
    %988 = vmatprep.subr.mxu0 0.0
    %989 = vmatpush1.msra.mxu0 %v846
    %990 = vmatprep.subr.mxu0 0.0
    %991 = vmatpush1.msra.mxu0 %v847
    %992 = vmatprep.subr.mxu0 0.0
    %993 = vmatpush1.msra.mxu0 %v848
    %994 = vmatprep.subr.mxu0 0.0
    %995 = vmatpush1.msra.mxu0 0.0
    %996 = vmatprep.subr.mxu0 0.0
    %997 = vmatpush1.msra.mxu0 0.0
    %998 = vmatprep.subr.mxu0 0.0
    %999 = vmatpush1.msra.mxu0 0.0
    %1000 = vmatprep.subr.mxu0 0.0
    %1001 = vmatpush1.msra.mxu0 0.0
    %1002 = vmatprep.subr.mxu0 0.0
    %1003 = vmatpush1.msra.mxu0 0.0
    %1004 = vmatprep.subr.mxu0 0.0
    %1005 = vmatpush1.msra.mxu0 0.0
    %1006 = vmatprep.subr.mxu0 0.0
    %1007 = vmatpush1.msra.mxu0 0.0
    %1008 = vmatprep.subr.mxu0 0.0
    %1009 = vmatpush1.msra.mxu0 0.0
    %1010 = vmatprep.subr.mxu0 0.0
    %1011 = vmatpush1.msra.mxu0 0.0
    %1012 = vmatprep.subr.mxu0 0.0
    %1013 = vmatpush1.msra.mxu0 0.0
    %1014 = vmatprep.subr.mxu0 0.0
    %1015 = vmatpush1.msra.mxu0 0.0
    %1016 = vmatprep.subr.mxu0 0.0
    %1017 = vmatpush1.msra.mxu0 0.0
    %1018 = vmatprep.subr.mxu0 0.0
    %1019 = vmatpush1.msra.mxu0 0.0
    %1020 = vmatprep.subr.mxu0 0.0
    %1021 = vmatpush1.msra.mxu0 0.0
    %1022 = vmatprep.subr.mxu0 0.0
    %1023 = vmatpush1.msra.mxu0 0.0
    %1024 = vmatprep.subr.mxu0 0.0
    %1025 = vmatpush1.msra.mxu0 0.0
    %1026 = vmatprep.mubr.f32.mxu0 0.0
    %1027 = vmatmul.mubr.f32.gmra.mrb[0].mxu0 %v780
    %v1028 = vpop.f32.mrb[0].mxu0
    %v1029 = vadd.f32 %v924, %v1028
    %v1030 = vpop.f32.mrb[0].mxu0
    %1031 = vmatprep.mubr.f32.mxu0 0.0
    %1032 = vmatmul.mubr.f32.gmra.mrb[0].mxu0 %v781
    %v1033 = vpop.f32.mrb[0].mxu0
    %v1034 = vadd.f32 %v929, %v1033
    %v1035 = vpop.f32.mrb[0].mxu0
    %1036 = vmatprep.mubr.f32.mxu0 0.0
    %1037 = vmatmul.mubr.f32.gmra.mrb[0].mxu0 %v782
    %v1038 = vpop.f32.mrb[0].mxu0
    %v1039 = vadd.f32 %v934, %v1038
    %v1040 = vpop.f32.mrb[0].mxu0
    %1041 = vmatprep.mubr.f32.mxu0 0.0
    %1042 = vmatmul.mubr.f32.gmra.mrb[0].mxu0 %v783
    %v1043 = vpop.f32.mrb[0].mxu0
    %v1044 = vadd.f32 %v939, %v1043
    %v1045 = vpop.f32.mrb[0].mxu0
    %1046 = vmatprep.mubr.f32.mxu0 0.0
    %1047 = vmatmul.mubr.f32.gmra.mrb[0].mxu0 %v796
    %v1048 = vpop.f32.mrb[0].mxu0
    %v1049 = vadd.f32 %v944, %v1048
    %v1050 = vpop.f32.mrb[0].mxu0
    %1051 = vmatprep.mubr.f32.mxu0 0.0
    %1052 = vmatmul.mubr.f32.gmra.mrb[0].mxu0 %v797
    %v1053 = vpop.f32.mrb[0].mxu0
    %v1054 = vadd.f32 %v949, %v1053
    %v1055 = vpop.f32.mrb[0].mxu0
    %1056 = vmatprep.mubr.f32.mxu0 0.0
    %1057 = vmatmul.mubr.f32.gmra.mrb[0].mxu0 %v798
    %v1058 = vpop.f32.mrb[0].mxu0
    %v1059 = vadd.f32 %v954, %v1058
    %v1060 = vpop.f32.mrb[0].mxu0
    %1061 = vmatprep.mubr.f32.mxu0 0.0
    %1062 = vmatmul.mubr.f32.gmra.mrb[0].mxu0 %v799
    %v1063 = vpop.f32.mrb[0].mxu0
    %v1064 = vadd.f32 %v959, %v1063
    %v1065 = vpop.f32.mrb[0].mxu0
    %1066 = vdwg.mxu0
    %v1067 = vadd.f32 %v1029, %v1034
    %v1068 = vadd.f32 %v1067, %v1039
    %v1069 = vadd.f32 %v1068, %v1044
    %v1070 = vadd.f32 %v1069, %v1049
    %v1071 = vadd.f32 %v1070, %v1054
    %v1072 = vadd.f32 %v1071, %v1059
    %v1073 = vadd.f32 %v1072, %v1064
    %v1074 = vrot.slane %v1073, 4
    %v1075 = vadd.f32 %v1073, %v1074
    %v1076 = vrot.slane %v1075, 2
    %v1077 = vadd.f32 %v1075, %v1076
    %v1078 = vrot.slane %v1077, 1
    %v1079 = vadd.f32 %v1077, %v1078
    %1080 = vmatprep.subr.mxu0 0.0
    %1081 = vmatpush1.msra.mxu0 %v206
    %1082 = vmatprep.subr.mxu0 0.0
    %1083 = vmatpush1.msra.mxu0 %v207
    %1084 = vmatprep.subr.mxu0 0.0
    %1085 = vmatpush1.msra.mxu0 %v208
    %1086 = vmatprep.subr.mxu0 0.0
    %1087 = vmatpush1.msra.mxu0 %v209
    %1088 = vmatprep.subr.mxu0 0.0
    %1089 = vmatpush1.msra.mxu0 %v210
    %1090 = vmatprep.subr.mxu0 0.0
    %1091 = vmatpush1.msra.mxu0 %v211
    %1092 = vmatprep.subr.mxu0 0.0
    %1093 = vmatpush1.msra.mxu0 %v212
    %1094 = vmatprep.subr.mxu0 0.0
    %1095 = vmatpush1.msra.mxu0 %v213
    %1096 = vmatprep.subr.mxu0 0.0
    %1097 = vmatpush1.msra.mxu0 %v214
    %1098 = vmatprep.subr.mxu0 0.0
    %1099 = vmatpush1.msra.mxu0 %v215
    %1100 = vmatprep.subr.mxu0 0.0
    %1101 = vmatpush1.msra.mxu0 %v216
    %1102 = vmatprep.subr.mxu0 0.0
    %1103 = vmatpush1.msra.mxu0 %v217
    %1104 = vmatprep.subr.mxu0 0.0
    %1105 = vmatpush1.msra.mxu0 %v218
    %1106 = vmatprep.subr.mxu0 0.0
    %1107 = vmatpush1.msra.mxu0 %v219
    %1108 = vmatprep.subr.mxu0 0.0
    %1109 = vmatpush1.msra.mxu0 %v220
    %1110 = vmatprep.subr.mxu0 0.0
    %1111 = vmatpush1.msra.mxu0 %v221
    %1112 = vmatprep.subr.mxu0 0.0
    %1113 = vmatpush1.msra.mxu0 0.0
    %1114 = vmatprep.subr.mxu0 0.0
    %1115 = vmatpush1.msra.mxu0 0.0
    %1116 = vmatprep.subr.mxu0 0.0
    %1117 = vmatpush1.msra.mxu0 0.0
    %1118 = vmatprep.subr.mxu0 0.0
    %1119 = vmatpush1.msra.mxu0 0.0
    %1120 = vmatprep.subr.mxu0 0.0
    %1121 = vmatpush1.msra.mxu0 0.0
    %1122 = vmatprep.subr.mxu0 0.0
    %1123 = vmatpush1.msra.mxu0 0.0
    %1124 = vmatprep.subr.mxu0 0.0
    %1125 = vmatpush1.msra.mxu0 0.0
    %1126 = vmatprep.subr.mxu0 0.0
    %1127 = vmatpush1.msra.mxu0 0.0
    %1128 = vmatprep.subr.mxu0 0.0
    %1129 = vmatpush1.msra.mxu0 0.0
    %1130 = vmatprep.subr.mxu0 0.0
    %1131 = vmatpush1.msra.mxu0 0.0
    %1132 = vmatprep.subr.mxu0 0.0
    %1133 = vmatpush1.msra.mxu0 0.0
    %1134 = vmatprep.subr.mxu0 0.0
    %1135 = vmatpush1.msra.mxu0 0.0
    %1136 = vmatprep.subr.mxu0 0.0
    %1137 = vmatpush1.msra.mxu0 0.0
    %1138 = vmatprep.subr.mxu0 0.0
    %1139 = vmatpush1.msra.mxu0 0.0
    %1140 = vmatprep.subr.mxu0 0.0
    %1141 = vmatpush1.msra.mxu0 0.0
    %1142 = vmatprep.subr.mxu0 0.0
    %1143 = vmatpush1.msra.mxu0 0.0
    %1144 = vmatprep.mubr.f32.mxu0 0.0
    %1145 = vmatmul.mubr.f32.gmra.mrb[0].mxu0 %v1079
    %v1146 = vpop.f32.mrb[0].mxu0
    %v1147 = vadd.f32 0.0, %v1146
    %v1148 = vpop.f32.mrb[0].mxu0
    %1149 = vdwg.mxu0
    %v1150 = vmul.f32 %v1029, %v1029
    %v1151 = vmul.f32 %v1034, %v1034
    %v1152 = vmul.f32 %v1039, %v1039
    %v1153 = vmul.f32 %v1044, %v1044
    %v1154 = vmul.f32 %v1049, %v1049
    %v1155 = vmul.f32 %v1054, %v1054
    %v1156 = vmul.f32 %v1059, %v1059
    %v1157 = vmul.f32 %v1064, %v1064
    %v1158 = vadd.f32 %v1150, %v1151
    %v1159 = vadd.f32 %v1158, %v1152
    %v1160 = vadd.f32 %v1159, %v1153
    %v1161 = vadd.f32 %v1160, %v1154
    %v1162 = vadd.f32 %v1161, %v1155
    %v1163 = vadd.f32 %v1162, %v1156
    %v1164 = vadd.f32 %v1163, %v1157
    %v1165 = vrot.slane %v1164, 4
    %v1166 = vadd.f32 %v1164, %v1165
    %v1167 = vrot.slane %v1166, 2
    %v1168 = vadd.f32 %v1166, %v1167
    %v1169 = vrot.slane %v1168, 1
    %v1170 = vadd.f32 %v1168, %v1169
    %1171 = vmatprep.subr.mxu0 0.0
    %1172 = vmatpush1.msra.mxu0 %v206
    %1173 = vmatprep.subr.mxu0 0.0
    %1174 = vmatpush1.msra.mxu0 %v207
    %1175 = vmatprep.subr.mxu0 0.0
    %1176 = vmatpush1.msra.mxu0 %v208
    %1177 = vmatprep.subr.mxu0 0.0
    %1178 = vmatpush1.msra.mxu0 %v209
    %1179 = vmatprep.subr.mxu0 0.0
    %1180 = vmatpush1.msra.mxu0 %v210
    %1181 = vmatprep.subr.mxu0 0.0
    %1182 = vmatpush1.msra.mxu0 %v211
    %1183 = vmatprep.subr.mxu0 0.0
    %1184 = vmatpush1.msra.mxu0 %v212
    %1185 = vmatprep.subr.mxu0 0.0
    %1186 = vmatpush1.msra.mxu0 %v213
    %1187 = vmatprep.subr.mxu0 0.0
    %1188 = vmatpush1.msra.mxu0 %v214
    %1189 = vmatprep.subr.mxu0 0.0
    %1190 = vmatpush1.msra.mxu0 %v215
    %1191 = vmatprep.subr.mxu0 0.0
    %1192 = vmatpush1.msra.mxu0 %v216
    %1193 = vmatprep.subr.mxu0 0.0
    %1194 = vmatpush1.msra.mxu0 %v217
    %1195 = vmatprep.subr.mxu0 0.0
    %1196 = vmatpush1.msra.mxu0 %v218
    %1197 = vmatprep.subr.mxu0 0.0
    %1198 = vmatpush1.msra.mxu0 %v219
    %1199 = vmatprep.subr.mxu0 0.0
    %1200 = vmatpush1.msra.mxu0 %v220
    %1201 = vmatprep.subr.mxu0 0.0
    %1202 = vmatpush1.msra.mxu0 %v221
    %1203 = vmatprep.subr.mxu0 0.0
    %1204 = vmatpush1.msra.mxu0 0.0
    %1205 = vmatprep.subr.mxu0 0.0
    %1206 = vmatpush1.msra.mxu0 0.0
    %1207 = vmatprep.subr.mxu0 0.0
    %1208 = vmatpush1.msra.mxu0 0.0
    %1209 = vmatprep.subr.mxu0 0.0
    %1210 = vmatpush1.msra.mxu0 0.0
    %1211 = vmatprep.subr.mxu0 0.0
    %1212 = vmatpush1.msra.mxu0 0.0
    %1213 = vmatprep.subr.mxu0 0.0
    %1214 = vmatpush1.msra.mxu0 0.0
    %1215 = vmatprep.subr.mxu0 0.0
    %1216 = vmatpush1.msra.mxu0 0.0
    %1217 = vmatprep.subr.mxu0 0.0
    %1218 = vmatpush1.msra.mxu0 0.0
    %1219 = vmatprep.subr.mxu0 0.0
    %1220 = vmatpush1.msra.mxu0 0.0
    %1221 = vmatprep.subr.mxu0 0.0
    %1222 = vmatpush1.msra.mxu0 0.0
    %1223 = vmatprep.subr.mxu0 0.0
    %1224 = vmatpush1.msra.mxu0 0.0
    %1225 = vmatprep.subr.mxu0 0.0
    %1226 = vmatpush1.msra.mxu0 0.0
    %1227 = vmatprep.subr.mxu0 0.0
    %1228 = vmatpush1.msra.mxu0 0.0
    %1229 = vmatprep.subr.mxu0 0.0
    %1230 = vmatpush1.msra.mxu0 0.0
    %1231 = vmatprep.subr.mxu0 0.0
    %1232 = vmatpush1.msra.mxu0 0.0
    %1233 = vmatprep.subr.mxu0 0.0
    %1234 = vmatpush1.msra.mxu0 0.0
    %1235 = vmatprep.mubr.f32.mxu0 0.0
    %1236 = vmatmul.mubr.f32.gmra.mrb[0].mxu0 %v1170
    %v1237 = vpop.f32.mrb[0].mxu0
    %v1238 = vadd.f32 0.0, %v1237
    %v1239 = vpop.f32.mrb[0].mxu0
    %1240 = vdwg.mxu0
    %v1241 = vmul.f32 %v1147, 0.0009765625
    %v1242 = vmul.f32 %v1238, 0.0009765625
    %v1243 = vmul.f32 %v1241, %v1241
    %v1244 = vsub.f32 %v1242, %v1243
    %s1245 = scalar_lea.vmem %s5, 1
    %v1246 = vld [vmem:[%s1245] sm:$0x1]
    %v1247 = vadd.f32 %v1244, 1e-05
    %v1248 = vrsqrt.pop %v1247
    %v1249 = vmul.f32 %v1246, %v1248
    %s1250 = scalar_lea.vmem %s6, 1
    %v1251 = vld [vmem:[%s1250] sm:$0x1]
    %v1252 = vmul.f32 %v1241, %v1249
    %v1253 = vsub.f32 %v1251, %v1252
    %v1255 = vlaneseq
    %v1256 = vshrl.u32 %v1255, 7
    %v1257 = vsub.s32 0, %v1256
    %v1258 = vrot.slane %v1249, %v1257
    %v1260 = vmul.f32 %v1029, %v1258
    %v1261 = vmul.f32 %v1034, %v1258
    %v1262 = vmul.f32 %v1039, %v1258
    %v1263 = vmul.f32 %v1044, %v1258
    %v1264 = vmul.f32 %v1049, %v1258
    %v1265 = vmul.f32 %v1054, %v1258
    %v1266 = vmul.f32 %v1059, %v1258
    %v1267 = vmul.f32 %v1064, %v1258
    %v1269 = vlaneseq
    %v1270 = vshrl.u32 %v1269, 7
    %v1271 = vsub.s32 0, %v1270
    %v1272 = vrot.slane %v1253, %v1271
    %v1274 = vadd.f32 %v1260, %v1272
    %v1275 = vadd.f32 %v1261, %v1272
    %v1276 = vadd.f32 %v1262, %v1272
    %v1277 = vadd.f32 %v1263, %v1272
    %v1278 = vadd.f32 %v1264, %v1272
    %v1279 = vadd.f32 %v1265, %v1272
    %v1280 = vadd.f32 %v1266, %v1272
    %v1281 = vadd.f32 %v1267, %v1272
    %v1282 = vmax.f32 %v1274, 0.0
    %v1283 = vmax.f32 %v1275, 0.0
    %v1284 = vmax.f32 %v1276, 0.0
    %v1285 = vmax.f32 %v1277, 0.0
    %v1286 = vmax.f32 %v1278, 0.0
    %v1287 = vmax.f32 %v1279, 0.0
    %v1288 = vmax.f32 %v1280, 0.0
    %v1289 = vmax.f32 %v1281, 0.0
    %1290 = vst [vmem:[%s9] sm:$0xff] %v1282
    %1291 = vst [vmem:[%s9 + $0x8] sm:$0xff] %v1283
    %1292 = vst [vmem:[%s9 + $0x10] sm:$0xff] %v1284
    %1293 = vst [vmem:[%s9 + $0x18] sm:$0xff] %v1285
    %1294 = vst [vmem:[%s9 + $0x20] sm:$0xff] %v1286
    %1295 = vst [vmem:[%s9 + $0x28] sm:$0xff] %v1287
    %1296 = vst [vmem:[%s9 + $0x30] sm:$0xff] %v1288
    %1297 = vst [vmem:[%s9 + $0x38] sm:$0xff] %v1289
    // Predicated region
    $region46: #{upds_forward.1} parent=1 // pred_check
      _
    $region47: #{upds_forward.1} parent=1 // pred_check_branch
      %1299 = sbr.rel (0) target = $region49
    $region48: #{upds_forward.1} parent=1 // pred_region
      _
    $region49: #{upds_forward.1} parent=1 // pred_fallthru
      _
    // Predicated region
    $region50: #{upds_forward.1} parent=1 // pred_check
      _
    $region51: #{upds_forward.1} parent=1 // pred_check_branch
      %1301 = sbr.rel (0) target = $region53
    $region52: #{upds_forward.1} parent=1 // pred_region
      _
    $region53: #{upds_forward.1} parent=1 // pred_fallthru
      _
    %1302 = vsyncpa [#allocation4], 1
    %1303 = vsyncpa [#allocation6], 1

</llo_original>
